<compile_context>
chip_gen: v7x
topology: tpu7x:2x2x1
jax: 0.10.0
libtpu: 0.0.40
codegen_flags: <defaults>
</compile_context>

<pallas_src>
import functools

import jax
import jax.numpy as jnp
from jax.experimental import pallas as pl
from jax.experimental.pallas import tpu as pltpu

HEAD_DIM = 8


def _flash_attn_kernel(qf_ref, kf_ref, wq_ref, wkv_ref, wo_ref, o_ref,
                       q_ref, m_ref, l_ref, acc_ref, *,
                       n_heads, head_dim, tk, n_kv, kf_resident):
    ki = pl.program_id(2)
    nk = pl.num_programs(2)
    ct = n_heads * head_dim

    @pl.when(ki == 0)
    def _init():
        m_ref[...] = jnp.full_like(m_ref, -jnp.inf)
        l_ref[...] = jnp.zeros_like(l_ref)
        acc_ref[...] = jnp.zeros_like(acc_ref)
        # Query projection only depends on (b, qi): compute once per q-tile.
        # (matmul_norm scale head_dim**-0.5 is pre-folded into wq host-side.)
        q_ref[...] = jnp.dot(wq_ref[...], qf_ref[...],
                             preferred_element_type=jnp.float32)        # (Ct, Tq)

    # Current kv chunk of key_feats, channel-major (Cin, Tk).
    if kf_resident:
        start = pl.multiple_of(ki * tk, tk)                # kf slab resident in VMEM
        kf_tile = kf_ref[:, pl.ds(start, tk)]
    else:
        kf_tile = kf_ref[...]                              # streamed (Cin, Tk) tile

    # Fused key/value projection: one MXU push per kv chunk.
    kv = jnp.dot(wkv_ref[...], kf_tile,
                 preferred_element_type=jnp.float32)                    # (2*Ct, Tk)
    q = q_ref[...]                                                      # (Ct, Tq)

    # Row used for the MXU denominator sum.  When the kv axis carries zero
    # padding (N % tk != 0) it doubles as the validity mask so padded key
    # columns never bias the softmax denominator (their v columns are already 0,
    # so the context matmul needs no masking).
    if n_kv % tk != 0:
        col = jax.lax.broadcasted_iota(jnp.int32, (1, tk), 1) + ki * tk
        sum_row = (col < n_kv).astype(jnp.float32)                      # (1, Tk)
    else:
        sum_row = jnp.ones((1, tk), jnp.float32)                        # (1, Tk)

    for h in range(n_heads):
        lo = h * head_dim
        hi = lo + head_dim
        qh = q[lo:hi, :]                          # (hd, Tq)
        kh = kv[lo:hi, :]                         # (hd, Tk)
        vh = kv[ct + lo:ct + hi, :]               # (hd, Tk)

        # sim stored transposed: (Tk, Tq); softmax stats land as (1, Tq) rows
        # (sublane-broadcastable) so no in-kernel transposes are needed.
        sim = jax.lax.dot_general(
            kh, qh, dimension_numbers=(((0,), (0,)), ((), ())),
            preferred_element_type=jnp.float32)                         # (Tk, Tq)

        m_prev = m_ref[h]                                               # (1, Tq)
        m_new = jnp.maximum(m_prev, jnp.max(sim, axis=0, keepdims=True))
        alpha = jnp.exp(m_prev - m_new)                                 # (1, Tq)
        p = jnp.exp(sim - m_new)                                        # (Tk, Tq)

        # Softmax denominator on the idle MXU instead of a cross-sublane VALU sum.
        l_sum = jnp.dot(sum_row, p, preferred_element_type=jnp.float32)  # (1, Tq)
        l_ref[h] = alpha * l_ref[h] + l_sum
        # Context: (hd, Tk) @ (Tk, Tq) -> (hd, Tq); contraction length Tk.
        acc_ref[lo:hi, :] = (alpha * acc_ref[lo:hi, :]
                             + jnp.dot(vh, p, preferred_element_type=jnp.float32))
        m_ref[h] = m_new

    @pl.when(ki == nk - 1)
    def _finalize():
        for h in range(n_heads):
            lo = h * head_dim
            hi = lo + head_dim
            # Exact reciprocal: runs once per q-tile on a (1, Tq) row (free-ish),
            # keeps closer parity with the PyTorch reference than approx mode.
            inv_l = pl.reciprocal(l_ref[h])                             # (1, Tq)
            acc_ref[lo:hi, :] = acc_ref[lo:hi, :] * inv_l
        # out_project: (Cout, Ct) @ (Ct, Tq) -> (Cout, Tq); lane-dense store along Tq.
        o_ref[...] = jnp.dot(wo_ref[...], acc_ref[...],
                             preferred_element_type=jnp.float32).astype(o_ref.dtype)


def _round_up(x, m):
    return -(-x // m) * m


def self_attention_block(query_feats, key_feats, wq, wk, wv, wo, *,
                         tq=1024, tk=2048,
                         kf_resident_max_bytes=16 * 1024 * 1024):
    """query_feats/key_feats: (B, C, D, H, W) NCDHW. Weights: (Cout, Cin). Returns NCDHW."""
    B, Cin, D, H, W = query_feats.shape
    N = D * H * W
    Ct = wq.shape[0]
    Cout = wo.shape[0]
    n_heads = Ct // HEAD_DIM
    f32 = 4

    # ---- tile selection -----------------------------------------------------
    # Tiles are 128-aligned; N is zero-padded per axis instead of falling back
    # to tq=tk=N (which would materialize the full (N, N) sim for unaligned N).
    tq = max(128, (min(tq, _round_up(N, 128)) // 128) * 128)
    tk = max(128, (min(tk, _round_up(N, 128)) // 128) * 128)
    # v7x cap: keep the per-step f32 (Tk, Tq) temporaries (sim/p) <= ~16 MiB each
    # so the ~32-40 MiB working set fits the 64 MiB / TC VMEM.
    MAX_TILE_ELEMS = 4 * 1024 * 1024
    while tq * tk > MAX_TILE_ELEMS:
        if tk >= tq and tk > 128:
            tk //= 2
        elif tq > 128:
            tq //= 2
        else:
            break
    # v7x megacore: keep >= 2 parallel grid units when the batch axis is 1.
    if B == 1 and tq >= N and N > 128:
        tq = max(128, _round_up((N + 1) // 2, 128))

    n_pad_q = _round_up(N, tq)
    n_pad_k = _round_up(N, tk)

    # Zero-copy NCDHW -> (B, C, N): channel-major in the kernel, no host transposes.
    qf = query_feats.reshape(B, Cin, N)
    kf = key_feats.reshape(B, Cin, N)
    if n_pad_q != N:
        qf = jnp.pad(qf, ((0, 0), (0, 0), (0, n_pad_q - N)))
    if n_pad_k != N:
        kf = jnp.pad(kf, ((0, 0), (0, 0), (0, n_pad_k - N)))

    # Per-batch key_feats residency: when the (Cin, Nk) slab (double-buffered)
    # is small enough, index it only on b so it is DMA'd once per batch instead
    # of being re-streamed (N/tq) times.
    kf_resident = (2 * Cin * n_pad_k * f32) <= kf_resident_max_bytes

    # Fold matmul_norm scale into wq; fuse key/value projection weights.
    wq_scaled = (wq * (HEAD_DIM ** -0.5)).astype(jnp.float32)
    wkv = jnp.concatenate([wk, wv], axis=0).astype(jnp.float32)          # (2*Ct, Cin)

    if kf_resident:
        kf_spec = pl.BlockSpec((None, Cin, n_pad_k), lambda b, qi, ki: (b, 0, 0))
    else:
        kf_spec = pl.BlockSpec((None, Cin, tk), lambda b, qi, ki: (b, 0, ki))

    # Explicit VMEM budget: dominated by the f32 (Tk, Tq) temporaries (sim, p,
    # one spare) plus (double-)buffered BlockSpec tiles and (Ct, Tq) scratch.
    kf_buf = Cin * (n_pad_k if kf_resident else tk) * f32
    budget = (3 * tq * tk * f32                      # sim + p (+ temp); heads sequential
              + 2 * Cin * tq * f32                   # qf tile, double-buffered
              + 2 * kf_buf                           # kf tile / resident slab
              + 2 * Cout * tq * f32                  # out tile, double-buffered
              + 2 * Ct * tq * f32                    # q + acc scratch
              + 2 * Ct * tk * f32                    # kv projection
              + 4 * Ct * Cin * f32)                  # weights
    vmem_limit = int(min(64 * 1024 * 1024, max(32 * 1024 * 1024, 1.5 * budget)))

    kernel = functools.partial(_flash_attn_kernel, n_heads=n_heads,
                               head_dim=HEAD_DIM, tk=tk, n_kv=N,
                               kf_resident=kf_resident)

    out = pl.pallas_call(
        kernel,
        out_shape=jax.ShapeDtypeStruct((B, Cout, n_pad_q), query_feats.dtype),
        grid_spec=pltpu.PrefetchScalarGridSpec(
            num_scalar_prefetch=0,
            grid=(B, n_pad_q // tq, n_pad_k // tk),
            in_specs=[
                pl.BlockSpec((None, Cin, tq), lambda b, qi, ki: (b, 0, qi)),
                kf_spec,
                pl.BlockSpec((Ct, Cin), lambda b, qi, ki: (0, 0)),
                pl.BlockSpec((2 * Ct, Cin), lambda b, qi, ki: (0, 0)),
                pl.BlockSpec((Cout, Ct), lambda b, qi, ki: (0, 0)),
            ],
            out_specs=pl.BlockSpec((None, Cout, tq), lambda b, qi, ki: (b, 0, qi)),
            scratch_shapes=[
                pltpu.VMEM((Ct, tq), jnp.float32),           # projected q tile
                pltpu.VMEM((n_heads, 1, tq), jnp.float32),   # running max m
                pltpu.VMEM((n_heads, 1, tq), jnp.float32),   # running denom l
                pltpu.VMEM((Ct, tq), jnp.float32),           # context accumulator
            ],
        ),
        compiler_params=pltpu.CompilerParams(
            dimension_semantics=("parallel", "parallel", "arbitrary"),
            vmem_limit_bytes=vmem_limit),
    )(qf, kf, wq_scaled, wkv, wo)

    if n_pad_q != N:
        out = out[:, :, :N]
    # (B, Cout, N) -> NCDHW (zero-copy reshape).
    return out.reshape(B, Cout, D, H, W)


def _reference(query_feats, key_feats, wq, wk, wv, wo):
    """Pure-JAX mirror of the PyTorch forward (for verification)."""
    B, C, D, H, W = query_feats.shape
    dhw = D * H * W
    hd = HEAD_DIM

    def conv1x1(x, w):  # x: (B, Cin, D, H, W), w: (Cout, Cin)
        return jnp.einsum('bcdhw,oc->bodhw', x, w)

    q = conv1x1(query_feats, wq).reshape(B, C // hd, hd, dhw).transpose(0, 1, 3, 2)
    k = conv1x1(key_feats, wk).reshape(B, C // hd, hd, dhw)
    v = conv1x1(key_feats, wv).reshape(B, C // hd, hd, dhw).transpose(0, 1, 3, 2)

    sim = jnp.einsum('bhnd,bhdm->bhnm', q, k) * hd ** (-0.5)
    sim = jax.nn.softmax(sim, axis=-1)
    ctx = jnp.einsum('bhnm,bhmd->bhnd', sim, v)
    ctx = ctx.transpose(0, 1, 3, 2).reshape(B, -1, D, H, W)
    return conv1x1(ctx, wo)


if __name__ == "__main__":
    key = jax.random.PRNGKey(0)
    C = 16                                     # channels, multiple of head_dim=8
    Ct, Cout = C, C                            # transform_channels == out_channels == C

    k0, k1, k2, k3, k4, k5 = jax.random.split(key, 6)
    wq = 0.1 * jax.random.normal(k2, (Ct, C), dtype=jnp.float32)
    wk = 0.1 * jax.random.normal(k3, (Ct, C), dtype=jnp.float32)
    wv = 0.1 * jax.random.normal(k4, (Ct, C), dtype=jnp.float32)
    wo = 0.1 * jax.random.normal(k5, (Cout, Ct), dtype=jnp.float32)

    def run_case(shape, **kw):
        _, _, D, H, W = shape
        qk = jax.random.fold_in(k0, D * H * W)
        kk = jax.random.fold_in(k1, D * H * W)
        qfeat = jax.random.normal(qk, shape, dtype=jnp.float32)
        kfeat = jax.random.normal(kk, shape, dtype=jnp.float32)
        out = self_attention_block(qfeat, kfeat, wq, wk, wv, wo, **kw)
        out = jax.block_until_ready(out)
        ref = _reference(qfeat, kfeat, wq, wk, wv, wo)
        assert out.shape == ref.shape, (out.shape, ref.shape)
        max_err = float(jnp.max(jnp.abs(out - ref)))
        assert jnp.allclose(out, ref, atol=2e-3, rtol=2e-3), max_err

    # 1) 128-aligned N=256, default (large) tiles, resident key slab.
    run_case((2, C, 2, 8, 16))
    # 2) unaligned N=189: exercises pad-to-128 + padded-kv-column masking.
    run_case((2, C, 3, 7, 9), tq=128, tk=128)
    # 3) streamed kf tiles + multi-tile online-softmax accumulation (grid 2x2x2).
    run_case((2, C, 2, 8, 16), tq=128, tk=128, kf_resident_max_bytes=0)

    print("KERNEL_OK")
</pallas_src>

<mosaic_0001>
module attributes {stable_mosaic.version = 11 : i64} {
  func.func @_flash_attn_kernel(%arg0: i32, %arg1: i32, %arg2: i32, %arg3: memref<1x16x256xf32, #tpu.memory_space<vmem>>, %arg4: memref<1x16x256xf32, #tpu.memory_space<vmem>>, %arg5: memref<16x16xf32, #tpu.memory_space<vmem>>, %arg6: memref<32x16xf32, #tpu.memory_space<vmem>>, %arg7: memref<16x16xf32, #tpu.memory_space<vmem>>, %arg8: memref<1x16x256xf32, #tpu.memory_space<vmem>>, %arg9: memref<16x256xf32, #tpu.memory_space<vmem>>, %arg10: memref<2x1x256xf32, #tpu.memory_space<vmem>>, %arg11: memref<2x1x256xf32, #tpu.memory_space<vmem>>, %arg12: memref<16x256xf32, #tpu.memory_space<vmem>>) attributes {dimension_semantics = [#tpu.dimension_semantics<parallel>, #tpu.dimension_semantics<parallel>, #tpu.dimension_semantics<arbitrary>], iteration_bounds = array<i64: 2, 1, 1>, scalar_prefetch = 0 : i64, scratch_operands = 4 : i64, tpu.core_type = #tpu.core_type<tc>, window_params = [{transform_indices = @transform_0, window_bounds = array<i64: 1, 16, 256>}, {transform_indices = @transform_1, window_bounds = array<i64: 1, 16, 256>}, {pipeline_mode = #tpu.pipeline_mode<synchronous>, transform_indices = @transform_2, window_bounds = array<i64: 16, 16>}, {pipeline_mode = #tpu.pipeline_mode<synchronous>, transform_indices = @transform_3, window_bounds = array<i64: 32, 16>}, {pipeline_mode = #tpu.pipeline_mode<synchronous>, transform_indices = @transform_4, window_bounds = array<i64: 16, 16>}, {transform_indices = @transform_5, window_bounds = array<i64: 1, 16, 256>}]} {
    %c0_i32 = arith.constant 0 : i32
    %0 = arith.cmpi eq, %arg2, %c0_i32 : i32
    %1 = arith.extui %0 : i1 to i32
    %c0_i32_0 = arith.constant 0 : i32
    %2 = arith.cmpi ne, %1, %c0_i32_0 : i32
    scf.if %2 {
      %cst_47 = arith.constant 0xFF800000 : f32
      %77 = vector.broadcast %cst_47 : f32 to vector<2x1x256xf32>
      %c0_48 = arith.constant 0 : index
      %c0_49 = arith.constant 0 : index
      %c0_50 = arith.constant 0 : index
      %78 = vector.load %arg10[%c0_48, %c0_49, %c0_50] : memref<2x1x256xf32, #tpu.memory_space<vmem>>, vector<2x1x256xf32>
      tpu.vector_store %arg10[%c0_48, %c0_49, %c0_50], %77 {strides = array<i32>} : memref<2x1x256xf32, #tpu.memory_space<vmem>>, vector<2x1x256xf32>,
      %cst_51 = arith.constant 0.000000e+00 : f32
      %79 = vector.broadcast %cst_51 : f32 to vector<2x1x256xf32>
      %c0_52 = arith.constant 0 : index
      %c0_53 = arith.constant 0 : index
      %c0_54 = arith.constant 0 : index
      %80 = vector.load %arg11[%c0_52, %c0_53, %c0_54] : memref<2x1x256xf32, #tpu.memory_space<vmem>>, vector<2x1x256xf32>
      tpu.vector_store %arg11[%c0_52, %c0_53, %c0_54], %79 {strides = array<i32>} : memref<2x1x256xf32, #tpu.memory_space<vmem>>, vector<2x1x256xf32>,
      %cst_55 = arith.constant 0.000000e+00 : f32
      %81 = vector.broadcast %cst_55 : f32 to vector<16x256xf32>
      %c0_56 = arith.constant 0 : index
      %c0_57 = arith.constant 0 : index
      %82 = vector.load %arg12[%c0_56, %c0_57] : memref<16x256xf32, #tpu.memory_space<vmem>>, vector<16x256xf32>
      tpu.vector_store %arg12[%c0_56, %c0_57], %81 {strides = array<i32>} : memref<16x256xf32, #tpu.memory_space<vmem>>, vector<16x256xf32>,
      %c0_58 = arith.constant 0 : index
      %c0_59 = arith.constant 0 : index
      %83 = vector.load %arg5[%c0_58, %c0_59] : memref<16x16xf32, #tpu.memory_space<vmem>>, vector<16x16xf32>
      %c0_60 = arith.constant 0 : index
      %c0_61 = arith.constant 0 : index
      %c0_62 = arith.constant 0 : index
      %84 = vector.load %arg3[%c0_60, %c0_61, %c0_62] : memref<1x16x256xf32, #tpu.memory_space<vmem>>, vector<1x16x256xf32>
      %85 = vector.shape_cast %84 : vector<1x16x256xf32> to vector<16x256xf32>
      %cst_63 = arith.constant dense<0.000000e+00> : vector<16x256xf32>
      %86 = tpu.matmul %83, %85, %cst_63 {dimension_numbers = #tpu.dot_dimension_numbers<[1], [0], [0], [1], [0, 0, 1, 1], [], []>} : vector<16x16xf32>, vector<16x256xf32>, vector<16x256xf32> -> vector<16x256xf32>
      %c0_64 = arith.constant 0 : index
      %c0_65 = arith.constant 0 : index
      %87 = vector.load %arg9[%c0_64, %c0_65] : memref<16x256xf32, #tpu.memory_space<vmem>>, vector<16x256xf32>
      tpu.vector_store %arg9[%c0_64, %c0_65], %86 {strides = array<i32>} : memref<16x256xf32, #tpu.memory_space<vmem>>, vector<16x256xf32>,
    } else {
    }
    %c256_i32 = arith.constant 256 : i32
    %3 = arith.muli %arg2, %c256_i32 : i32
    %4 = tpu.assume_multiple %3, 256 : i32
    %c0 = arith.constant 0 : index
    %c0_1 = arith.constant 0 : index
    %5 = arith.index_cast %4 : i32 to index
    %6 = vector.load %arg4[%c0, %c0_1, %5] : memref<1x16x256xf32, #tpu.memory_space<vmem>>, vector<1x16x256xf32>
    %7 = vector.shape_cast %6 : vector<1x16x256xf32> to vector<16x256xf32>
    %c0_2 = arith.constant 0 : index
    %c0_3 = arith.constant 0 : index
    %8 = vector.load %arg6[%c0_2, %c0_3] : memref<32x16xf32, #tpu.memory_space<vmem>>, vector<32x16xf32>
    %cst = arith.constant dense<0.000000e+00> : vector<32x256xf32>
    %9 = tpu.matmul %8, %7, %cst {dimension_numbers = #tpu.dot_dimension_numbers<[1], [0], [0], [1], [0, 0, 1, 1], [], []>} : vector<32x16xf32>, vector<16x256xf32>, vector<32x256xf32> -> vector<32x256xf32>
    %c0_4 = arith.constant 0 : index
    %c0_5 = arith.constant 0 : index
    %10 = vector.load %arg9[%c0_4, %c0_5] : memref<16x256xf32, #tpu.memory_space<vmem>>, vector<16x256xf32>
    %cst_6 = arith.constant 1.000000e+00 : f32
    %11 = vector.broadcast %cst_6 : f32 to vector<1x256xf32>
    %12 = vector.extract_strided_slice %10 {offsets = [0, 0], sizes = [8, 256], strides = [1, 1]} : vector<16x256xf32> to vector<8x256xf32>
    %13 = vector.extract_strided_slice %9 {offsets = [0, 0], sizes = [8, 256], strides = [1, 1]} : vector<32x256xf32> to vector<8x256xf32>
    %14 = vector.extract_strided_slice %9 {offsets = [16, 0], sizes = [8, 256], strides = [1, 1]} : vector<32x256xf32> to vector<8x256xf32>
    %cst_7 = arith.constant dense<0.000000e+00> : vector<256x256xf32>
    %15 = tpu.matmul %13, %12, %cst_7 {dimension_numbers = #tpu.dot_dimension_numbers<[0], [0], [1], [1], [0, 1, 1, 1], [], []>} : vector<8x256xf32>, vector<8x256xf32>, vector<256x256xf32> -> vector<256x256xf32>
    %c0_8 = arith.constant 0 : index
    %c0_9 = arith.constant 0 : index
    %c0_10 = arith.constant 0 : index
    %16 = vector.load %arg10[%c0_8, %c0_9, %c0_10] : memref<2x1x256xf32, #tpu.memory_space<vmem>>, vector<1x1x256xf32>
    %17 = vector.shape_cast %16 : vector<1x1x256xf32> to vector<1x256xf32>
    %cst_11 = arith.constant dense<0xFF800000> : vector<256xf32>
    %18 = vector.multi_reduction <maximumf>, %15, %cst_11 [0] : vector<256x256xf32> to vector<256xf32>
    %19 = vector.shape_cast %18 : vector<256xf32> to vector<1x256xf32>
    %20 = arith.maximumf %17, %19 : vector<1x256xf32>
    %21 = arith.subf %17, %20 : vector<1x256xf32>
    %22 = math.exp %21 : vector<1x256xf32>
    %23 = vector.broadcast %20 : vector<1x256xf32> to vector<256x256xf32>
    %24 = arith.subf %15, %23 : vector<256x256xf32>
    %25 = math.exp %24 : vector<256x256xf32>
    %cst_12 = arith.constant dense<0.000000e+00> : vector<1x256xf32>
    %26 = tpu.matmul %11, %25, %cst_12 {dimension_numbers = #tpu.dot_dimension_numbers<[1], [0], [0], [1], [0, 0, 1, 1], [], []>} : vector<1x256xf32>, vector<256x256xf32>, vector<1x256xf32> -> vector<1x256xf32>
    %c0_13 = arith.constant 0 : index
    %c0_14 = arith.constant 0 : index
    %c0_15 = arith.constant 0 : index
    %27 = vector.load %arg11[%c0_13, %c0_14, %c0_15] : memref<2x1x256xf32, #tpu.memory_space<vmem>>, vector<1x1x256xf32>
    %28 = vector.shape_cast %27 : vector<1x1x256xf32> to vector<1x256xf32>
    %29 = arith.mulf %22, %28 : vector<1x256xf32>
    %30 = arith.addf %29, %26 : vector<1x256xf32>
    %c0_16 = arith.constant 0 : index
    %c0_17 = arith.constant 0 : index
    %c0_18 = arith.constant 0 : index
    %31 = vector.load %arg11[%c0_16, %c0_17, %c0_18] : memref<2x1x256xf32, #tpu.memory_space<vmem>>, vector<1x1x256xf32>
    %32 = vector.shape_cast %31 : vector<1x1x256xf32> to vector<1x256xf32>
    %33 = vector.shape_cast %30 : vector<1x256xf32> to vector<1x1x256xf32>
    tpu.vector_store %arg11[%c0_16, %c0_17, %c0_18], %33 {strides = array<i32>} : memref<2x1x256xf32, #tpu.memory_space<vmem>>, vector<1x1x256xf32>,
    %c0_19 = arith.constant 0 : index
    %c0_20 = arith.constant 0 : index
    %34 = vector.load %arg12[%c0_19, %c0_20] : memref<16x256xf32, #tpu.memory_space<vmem>>, vector<8x256xf32>
    %35 = vector.broadcast %22 : vector<1x256xf32> to vector<8x256xf32>
    %36 = arith.mulf %35, %34 : vector<8x256xf32>
    %cst_21 = arith.constant dense<0.000000e+00> : vector<8x256xf32>
    %37 = tpu.matmul %14, %25, %cst_21 {dimension_numbers = #tpu.dot_dimension_numbers<[1], [0], [0], [1], [0, 0, 1, 1], [], []>} : vector<8x256xf32>, vector<256x256xf32>, vector<8x256xf32> -> vector<8x256xf32>
    %38 = arith.addf %36, %37 : vector<8x256xf32>
    %c0_22 = arith.constant 0 : index
    %c0_23 = arith.constant 0 : index
    %39 = vector.load %arg12[%c0_22, %c0_23] : memref<16x256xf32, #tpu.memory_space<vmem>>, vector<8x256xf32>
    tpu.vector_store %arg12[%c0_22, %c0_23], %38 {strides = array<i32>} : memref<16x256xf32, #tpu.memory_space<vmem>>, vector<8x256xf32>,
    %c0_24 = arith.constant 0 : index
    %c0_25 = arith.constant 0 : index
    %c0_26 = arith.constant 0 : index
    %40 = vector.load %arg10[%c0_24, %c0_25, %c0_26] : memref<2x1x256xf32, #tpu.memory_space<vmem>>, vector<1x1x256xf32>
    %41 = vector.shape_cast %40 : vector<1x1x256xf32> to vector<1x256xf32>
    %42 = vector.shape_cast %20 : vector<1x256xf32> to vector<1x1x256xf32>
    tpu.vector_store %arg10[%c0_24, %c0_25, %c0_26], %42 {strides = array<i32>} : memref<2x1x256xf32, #tpu.memory_space<vmem>>, vector<1x1x256xf32>,
    %43 = vector.extract_strided_slice %10 {offsets = [8, 0], sizes = [8, 256], strides = [1, 1]} : vector<16x256xf32> to vector<8x256xf32>
    %44 = vector.extract_strided_slice %9 {offsets = [8, 0], sizes = [8, 256], strides = [1, 1]} : vector<32x256xf32> to vector<8x256xf32>
    %45 = vector.extract_strided_slice %9 {offsets = [24, 0], sizes = [8, 256], strides = [1, 1]} : vector<32x256xf32> to vector<8x256xf32>
    %cst_27 = arith.constant dense<0.000000e+00> : vector<256x256xf32>
    %46 = tpu.matmul %44, %43, %cst_27 {dimension_numbers = #tpu.dot_dimension_numbers<[0], [0], [1], [1], [0, 1, 1, 1], [], []>} : vector<8x256xf32>, vector<8x256xf32>, vector<256x256xf32> -> vector<256x256xf32>
    %c1 = arith.constant 1 : index
    %c0_28 = arith.constant 0 : index
    %c0_29 = arith.constant 0 : index
    %47 = vector.load %arg10[%c1, %c0_28, %c0_29] : memref<2x1x256xf32, #tpu.memory_space<vmem>>, vector<1x1x256xf32>
    %48 = vector.shape_cast %47 : vector<1x1x256xf32> to vector<1x256xf32>
    %cst_30 = arith.constant dense<0xFF800000> : vector<256xf32>
    %49 = vector.multi_reduction <maximumf>, %46, %cst_30 [0] : vector<256x256xf32> to vector<256xf32>
    %50 = vector.shape_cast %49 : vector<256xf32> to vector<1x256xf32>
    %51 = arith.maximumf %48, %50 : vector<1x256xf32>
    %52 = arith.subf %48, %51 : vector<1x256xf32>
    %53 = math.exp %52 : vector<1x256xf32>
    %54 = vector.broadcast %51 : vector<1x256xf32> to vector<256x256xf32>
    %55 = arith.subf %46, %54 : vector<256x256xf32>
    %56 = math.exp %55 : vector<256x256xf32>
    %cst_31 = arith.constant dense<0.000000e+00> : vector<1x256xf32>
    %57 = tpu.matmul %11, %56, %cst_31 {dimension_numbers = #tpu.dot_dimension_numbers<[1], [0], [0], [1], [0, 0, 1, 1], [], []>} : vector<1x256xf32>, vector<256x256xf32>, vector<1x256xf32> -> vector<1x256xf32>
    %c1_32 = arith.constant 1 : index
    %c0_33 = arith.constant 0 : index
    %c0_34 = arith.constant 0 : index
    %58 = vector.load %arg11[%c1_32, %c0_33, %c0_34] : memref<2x1x256xf32, #tpu.memory_space<vmem>>, vector<1x1x256xf32>
    %59 = vector.shape_cast %58 : vector<1x1x256xf32> to vector<1x256xf32>
    %60 = arith.mulf %53, %59 : vector<1x256xf32>
    %61 = arith.addf %60, %57 : vector<1x256xf32>
    %c1_35 = arith.constant 1 : index
    %c0_36 = arith.constant 0 : index
    %c0_37 = arith.constant 0 : index
    %62 = vector.load %arg11[%c1_35, %c0_36, %c0_37] : memref<2x1x256xf32, #tpu.memory_space<vmem>>, vector<1x1x256xf32>
    %63 = vector.shape_cast %62 : vector<1x1x256xf32> to vector<1x256xf32>
    %64 = vector.shape_cast %61 : vector<1x256xf32> to vector<1x1x256xf32>
    tpu.vector_store %arg11[%c1_35, %c0_36, %c0_37], %64 {strides = array<i32>} : memref<2x1x256xf32, #tpu.memory_space<vmem>>, vector<1x1x256xf32>,
    %c8 = arith.constant 8 : index
    %c0_38 = arith.constant 0 : index
    %65 = vector.load %arg12[%c8, %c0_38] : memref<16x256xf32, #tpu.memory_space<vmem>>, vector<8x256xf32>
    %66 = vector.broadcast %53 : vector<1x256xf32> to vector<8x256xf32>
    %67 = arith.mulf %66, %65 : vector<8x256xf32>
    %cst_39 = arith.constant dense<0.000000e+00> : vector<8x256xf32>
    %68 = tpu.matmul %45, %56, %cst_39 {dimension_numbers = #tpu.dot_dimension_numbers<[1], [0], [0], [1], [0, 0, 1, 1], [], []>} : vector<8x256xf32>, vector<256x256xf32>, vector<8x256xf32> -> vector<8x256xf32>
    %69 = arith.addf %67, %68 : vector<8x256xf32>
    %c8_40 = arith.constant 8 : index
    %c0_41 = arith.constant 0 : index
    %70 = vector.load %arg12[%c8_40, %c0_41] : memref<16x256xf32, #tpu.memory_space<vmem>>, vector<8x256xf32>
    tpu.vector_store %arg12[%c8_40, %c0_41], %69 {strides = array<i32>} : memref<16x256xf32, #tpu.memory_space<vmem>>, vector<8x256xf32>,
    %c1_42 = arith.constant 1 : index
    %c0_43 = arith.constant 0 : index
    %c0_44 = arith.constant 0 : index
    %71 = vector.load %arg10[%c1_42, %c0_43, %c0_44] : memref<2x1x256xf32, #tpu.memory_space<vmem>>, vector<1x1x256xf32>
    %72 = vector.shape_cast %71 : vector<1x1x256xf32> to vector<1x256xf32>
    %73 = vector.shape_cast %51 : vector<1x256xf32> to vector<1x1x256xf32>
    tpu.vector_store %arg10[%c1_42, %c0_43, %c0_44], %73 {strides = array<i32>} : memref<2x1x256xf32, #tpu.memory_space<vmem>>, vector<1x1x256xf32>,
    %c0_i32_45 = arith.constant 0 : i32
    %74 = arith.cmpi eq, %arg2, %c0_i32_45 : i32
    %75 = arith.extui %74 : i1 to i32
    %c0_i32_46 = arith.constant 0 : i32
    %76 = arith.cmpi ne, %75, %c0_i32_46 : i32
    scf.if %76 {
      %c0_47 = arith.constant 0 : index
      %c0_48 = arith.constant 0 : index
      %c0_49 = arith.constant 0 : index
      %77 = vector.load %arg11[%c0_47, %c0_48, %c0_49] : memref<2x1x256xf32, #tpu.memory_space<vmem>>, vector<1x1x256xf32>
      %78 = vector.shape_cast %77 : vector<1x1x256xf32> to vector<1x256xf32>
      %79 = tpu.reciprocal %78 : vector<1x256xf32> -> vector<1x256xf32>
      %c0_50 = arith.constant 0 : index
      %c0_51 = arith.constant 0 : index
      %80 = vector.load %arg12[%c0_50, %c0_51] : memref<16x256xf32, #tpu.memory_space<vmem>>, vector<8x256xf32>
      %81 = vector.broadcast %79 : vector<1x256xf32> to vector<8x256xf32>
      %82 = arith.mulf %80, %81 : vector<8x256xf32>
      %c0_52 = arith.constant 0 : index
      %c0_53 = arith.constant 0 : index
      %83 = vector.load %arg12[%c0_52, %c0_53] : memref<16x256xf32, #tpu.memory_space<vmem>>, vector<8x256xf32>
      tpu.vector_store %arg12[%c0_52, %c0_53], %82 {strides = array<i32>} : memref<16x256xf32, #tpu.memory_space<vmem>>, vector<8x256xf32>,
      %c1_54 = arith.constant 1 : index
      %c0_55 = arith.constant 0 : index
      %c0_56 = arith.constant 0 : index
      %84 = vector.load %arg11[%c1_54, %c0_55, %c0_56] : memref<2x1x256xf32, #tpu.memory_space<vmem>>, vector<1x1x256xf32>
      %85 = vector.shape_cast %84 : vector<1x1x256xf32> to vector<1x256xf32>
      %86 = tpu.reciprocal %85 : vector<1x256xf32> -> vector<1x256xf32>
      %c8_57 = arith.constant 8 : index
      %c0_58 = arith.constant 0 : index
      %87 = vector.load %arg12[%c8_57, %c0_58] : memref<16x256xf32, #tpu.memory_space<vmem>>, vector<8x256xf32>
      %88 = vector.broadcast %86 : vector<1x256xf32> to vector<8x256xf32>
      %89 = arith.mulf %87, %88 : vector<8x256xf32>
      %c8_59 = arith.constant 8 : index
      %c0_60 = arith.constant 0 : index
      %90 = vector.load %arg12[%c8_59, %c0_60] : memref<16x256xf32, #tpu.memory_space<vmem>>, vector<8x256xf32>
      tpu.vector_store %arg12[%c8_59, %c0_60], %89 {strides = array<i32>} : memref<16x256xf32, #tpu.memory_space<vmem>>, vector<8x256xf32>,
      %c0_61 = arith.constant 0 : index
      %c0_62 = arith.constant 0 : index
      %91 = vector.load %arg7[%c0_61, %c0_62] : memref<16x16xf32, #tpu.memory_space<vmem>>, vector<16x16xf32>
      %c0_63 = arith.constant 0 : index
      %c0_64 = arith.constant 0 : index
      %92 = vector.load %arg12[%c0_63, %c0_64] : memref<16x256xf32, #tpu.memory_space<vmem>>, vector<16x256xf32>
      %cst_65 = arith.constant dense<0.000000e+00> : vector<16x256xf32>
      %93 = tpu.matmul %91, %92, %cst_65 {dimension_numbers = #tpu.dot_dimension_numbers<[1], [0], [0], [1], [0, 0, 1, 1], [], []>} : vector<16x16xf32>, vector<16x256xf32>, vector<16x256xf32> -> vector<16x256xf32>
      %c0_66 = arith.constant 0 : index
      %c0_67 = arith.constant 0 : index
      %c0_68 = arith.constant 0 : index
      %94 = vector.load %arg8[%c0_66, %c0_67, %c0_68] : memref<1x16x256xf32, #tpu.memory_space<vmem>>, vector<1x16x256xf32>
      %95 = vector.shape_cast %94 : vector<1x16x256xf32> to vector<16x256xf32>
      %96 = vector.shape_cast %93 : vector<16x256xf32> to vector<1x16x256xf32>
      tpu.vector_store %arg8[%c0_66, %c0_67, %c0_68], %96 {strides = array<i32>} : memref<1x16x256xf32, #tpu.memory_space<vmem>>, vector<1x16x256xf32>,
    } else {
    }
    return
  }
  func.func @transform_0(%arg0: i32, %arg1: i32, %arg2: i32) -> (i32, i32, i32) {
    %c0_i32 = arith.constant 0 : i32
    %c0_i32_0 = arith.constant 0 : i32
    return %arg0, %c0_i32, %arg1 : i32, i32, i32
  }
  func.func @transform_1(%arg0: i32, %arg1: i32, %arg2: i32) -> (i32, i32, i32) {
    %c0_i32 = arith.constant 0 : i32
    %c0_i32_0 = arith.constant 0 : i32
    %c0_i32_1 = arith.constant 0 : i32
    return %arg0, %c0_i32, %c0_i32_0 : i32, i32, i32
  }
  func.func @transform_2(%arg0: i32, %arg1: i32, %arg2: i32) -> (i32, i32) {
    %c0_i32 = arith.constant 0 : i32
    %c0_i32_0 = arith.constant 0 : i32
    %c0_i32_1 = arith.constant 0 : i32
    return %c0_i32, %c0_i32_0 : i32, i32
  }
  func.func @transform_3(%arg0: i32, %arg1: i32, %arg2: i32) -> (i32, i32) {
    %c0_i32 = arith.constant 0 : i32
    %c0_i32_0 = arith.constant 0 : i32
    %c0_i32_1 = arith.constant 0 : i32
    return %c0_i32, %c0_i32_0 : i32, i32
  }
  func.func @transform_4(%arg0: i32, %arg1: i32, %arg2: i32) -> (i32, i32) {
    %c0_i32 = arith.constant 0 : i32
    %c0_i32_0 = arith.constant 0 : i32
    %c0_i32_1 = arith.constant 0 : i32
    return %c0_i32, %c0_i32_0 : i32, i32
  }
  func.func @transform_5(%arg0: i32, %arg1: i32, %arg2: i32) -> (i32, i32, i32) {
    %c0_i32 = arith.constant 0 : i32
    %c0_i32_0 = arith.constant 0 : i32
    return %arg0, %c0_i32, %arg1 : i32, i32, i32
  }
}

</mosaic_0001>

<llo_original>
// kernel: tpu_custom_call.1
$region0: #{tpu_custom_call.1}
  #allocation0 [shape = 'u32[]', space=smem, size = 0x4, offset = 0x4, fixed_abs, tag = 'smem constant byte address 0x4 - core index']
  #allocation1 [shape = 'u32[144,128]{1,0:T(1,128)}', space=vmem, size = 0x12000, scoped, tag = 'internal scratch']
  #allocation2 [shape = 'f32[16,256]{1,0:T(8,128)}', space=vmem, size = 0x4000, scoped, tag = 'scratch operand']
  #allocation3 [shape = 'f32[2,1,256]{2,1,0:T(1,128)}', space=vmem, size = 0x800, scoped, tag = 'scratch operand']
  #allocation4 [shape = 'f32[2,1,256]{2,1,0:T(1,128)}', space=vmem, size = 0x800, scoped, tag = 'scratch operand']
  #allocation5 [shape = 'f32[16,256]{1,0:T(8,128)}', space=vmem, size = 0x4000, scoped, tag = 'scratch operand']
  %s0 = inlined_call_operand.hbm [shape: f32[2,16,256], index: 0, kind: input, shape index: {}]
  %s1 = inlined_call_operand.hbm [shape: f32[2,16,256], index: 1, kind: input, shape index: {}]
  %s2 = inlined_call_operand.vmem [shape: f32[16,16], index: 2, kind: input, shape index: {}]
  %s3 = inlined_call_operand.vmem [shape: f32[32,16], index: 3, kind: input, shape index: {}]
  %s4 = inlined_call_operand.vmem [shape: f32[16,16], index: 4, kind: input, shape index: {}]
  %s5 = inlined_call_operand.hbm [shape: f32[2,16,256], index: 5, kind: output, shape index: {}]
  %s6 = sld [smem:[#allocation0]]
  $region69: #{tpu_custom_call.1} parent=0
    _
  %s8 = ssub.s32 1, %s6
  %s9 = scalar_select 0, %s8, %s6
  $region1: #{tpu_custom_call.1} parent=0
    #allocation6 [shape = 'u8[32768]{0}', space=vmem, size = 0x8000, scoped, tag = 'input window, operand 0']
    #allocation7 [shape = 's32[2]{0}', space=sflag, size = 0x8, scoped, tag = 'scoped memory for tpu_custom_call.1']
    #allocation8 [shape = 's32[2]{0}', space=sflag, size = 0x8, scoped, tag = 'scoped memory for tpu_custom_call.1']
    #allocation9 [shape = 'u8[32768]{0}', space=vmem, size = 0x8000, scoped, tag = 'input window, operand 1']
    #allocation10 [shape = 's32[2]{0}', space=sflag, size = 0x8, scoped, tag = 'scoped memory for tpu_custom_call.1']
    #allocation11 [shape = 'u8[32768]{0}', space=vmem, size = 0x8000, scoped, tag = 'output window, operand 0']
    %10 = vsyncpa [#allocation7], 0
    %s11 = scalar_lea.sflag [#allocation7], 1
    %12 = vsyncpa %s11, 0
    %13 = vsyncpa [#allocation10], 0
    %s14 = scalar_lea.sflag [#allocation10], 1
    %15 = vsyncpa %s14, 0
    %16 = vsyncpa [#allocation8], 0
    %s17 = scalar_lea.sflag [#allocation8], 1
    %18 = vsyncpa %s17, 0
    loop: start=0, step=1, limit=4
    $region2: #{tpu_custom_call.1} parent=1 // loop_pre_header
      _
    $region3: #{tpu_custom_call.1} parent=1 // loop_header
      %s20 = sphi 0, %s24
      %p21 = scmp.ge.s32.totalorder %s20, 4
      %s27 = sphi 0, %s46
      %s28 = sphi 0, %s42
      %s29 = sphi 0, %s38
      %s30 = sphi 0, %s27
      %s31 = sphi 0, %s28
      %s32 = sphi 0, %s29
      %s33 = sphi 0, %s30
      %s34 = sphi 0, %s31
      %s35 = sphi 0, %s32
      %s51 = sphi 0, %s53
      %s54 = sphi 0, %s51
      %s55 = sphi 0, %s54
      %s71 = sphi 0, %s55
      %s77 = sphi 0, %s79
      %s80 = sphi 0, %s77
      %s81 = sphi 0, %s80
      %s97 = sphi 0, %s81
      %s101 = sphi 0, %s101
      %s103 = sphi 0, %s101
      %s104 = sphi 0, %s103
      %s118 = sphi 0, %s104
      %s122 = sphi 0, %s122
      %s124 = sphi 0, %s122
      %s125 = sphi 0, %s124
      %s139 = sphi 0, %s125
      %s143 = sphi 0, %s143
      %s145 = sphi 0, %s143
      %s146 = sphi 0, %s145
      %s160 = sphi 0, %s146
      %s168 = sphi 0, %s170
      %s171 = sphi 0, %s168
      %s172 = sphi 0, %s171
      %s188 = sphi 0, %s172
    $region4: #{tpu_custom_call.1} parent=1 // loop_header_branch
      %23 = sbr.rel (%p21) target = $region8
    $region5: #{tpu_custom_call.1} parent=1 // loop_body
      %s25 = ssub.s32 %s20, 1
      %s26 = ssub.s32 %s20, 2
      %s36 = sadd.s32 1, %s29
      %p37 = scmp.ge.s32.totalorder %s36, 1
      %s38 = scalar_select %p37, 0, %s36
      %s39 = sadd.s32 1, %s28
      %s40 = scalar_select %p37, %s39, %s28
      %p41 = scmp.ge.s32.totalorder %s40, 1
      %s42 = scalar_select %p41, 0, %s40
      %s43 = sadd.s32 1, %s27
      %s44 = scalar_select %p41, %s43, %s27
      %p45 = scmp.ge.s32.totalorder %s44, 2
      %s46 = scalar_select %p45, 0, %s44
      %s47 = ssub.s32 %s27, %s46
      %s48 = ssub.s32 %s28, %s42
      %s49 = sor.u32 %s47, %s48
      %p50 = scmp.eq.s32.totalorder %s49, 0
      %s52 = sadd.s32 %s51, 1
      %s53 = scalar_select %p50, %s51, %s52
      %p56 = pneg %p50
      %p57 = scmp.eq.s32.totalorder %s20, 1
      %p58 = por %p56, %p57
      %p59 = scmp.ne.s32.totalorder %s51, %s54
      %p60 = scmp.eq.s32.totalorder %s20, 0
      %p61 = por %p59, %p60
      %p62 = scmp.ne.s32.totalorder %s51, %s54
      %p63 = scmp.eq.s32.totalorder %s25, 1
      %p64 = por %p62, %p63
      %p65 = scmp.ne.s32.totalorder %s54, %s55
      %p66 = scmp.eq.s32.totalorder %s25, 0
      %p67 = por %p65, %p66
      %p68 = scmp.ne.s32.totalorder %s54, %s55
      %p69 = scmp.eq.s32.totalorder %s26, 1
      %p70 = por %p68, %p69
      %p72 = scmp.ne.s32.totalorder %s55, %s71
      %p73 = scmp.eq.s32.totalorder %s26, 0
      %p74 = por %p72, %p73
      %s75 = ssub.s32 %s27, %s46
      %p76 = scmp.eq.s32.totalorder %s75, 0
      %s78 = sadd.s32 %s77, 1
      %s79 = scalar_select %p76, %s77, %s78
      %p82 = pneg %p76
      %p83 = scmp.eq.s32.totalorder %s20, 1
      %p84 = por %p82, %p83
      %p85 = scmp.ne.s32.totalorder %s77, %s80
      %p86 = scmp.eq.s32.totalorder %s20, 0
      %p87 = por %p85, %p86
      %p88 = scmp.ne.s32.totalorder %s77, %s80
      %p89 = scmp.eq.s32.totalorder %s25, 1
      %p90 = por %p88, %p89
      %p91 = scmp.ne.s32.totalorder %s80, %s81
      %p92 = scmp.eq.s32.totalorder %s25, 0
      %p93 = por %p91, %p92
      %p94 = scmp.ne.s32.totalorder %s80, %s81
      %p95 = scmp.eq.s32.totalorder %s26, 1
      %p96 = por %p94, %p95
      %p98 = scmp.ne.s32.totalorder %s81, %s97
      %p99 = scmp.eq.s32.totalorder %s26, 0
      %p100 = por %p98, %p99
      %s102 = sadd.s32 %s101, 1
      %p105 = scmp.eq.s32.totalorder %s20, 1
      %p106 = scmp.ne.s32.totalorder %s101, %s103
      %p107 = scmp.eq.s32.totalorder %s20, 0
      %p108 = por %p106, %p107
      %p109 = scmp.ne.s32.totalorder %s101, %s103
      %p110 = scmp.eq.s32.totalorder %s25, 1
      %p111 = por %p109, %p110
      %p112 = scmp.ne.s32.totalorder %s103, %s104
      %p113 = scmp.eq.s32.totalorder %s25, 0
      %p114 = por %p112, %p113
      %p115 = scmp.ne.s32.totalorder %s103, %s104
      %p116 = scmp.eq.s32.totalorder %s26, 1
      %p117 = por %p115, %p116
      %p119 = scmp.ne.s32.totalorder %s104, %s118
      %p120 = scmp.eq.s32.totalorder %s26, 0
      %p121 = por %p119, %p120
      %s123 = sadd.s32 %s122, 1
      %p126 = scmp.eq.s32.totalorder %s20, 1
      %p127 = scmp.ne.s32.totalorder %s122, %s124
      %p128 = scmp.eq.s32.totalorder %s20, 0
      %p129 = por %p127, %p128
      %p130 = scmp.ne.s32.totalorder %s122, %s124
      %p131 = scmp.eq.s32.totalorder %s25, 1
      %p132 = por %p130, %p131
      %p133 = scmp.ne.s32.totalorder %s124, %s125
      %p134 = scmp.eq.s32.totalorder %s25, 0
      %p135 = por %p133, %p134
      %p136 = scmp.ne.s32.totalorder %s124, %s125
      %p137 = scmp.eq.s32.totalorder %s26, 1
      %p138 = por %p136, %p137
      %p140 = scmp.ne.s32.totalorder %s125, %s139
      %p141 = scmp.eq.s32.totalorder %s26, 0
      %p142 = por %p140, %p141
      %s144 = sadd.s32 %s143, 1
      %p147 = scmp.eq.s32.totalorder %s20, 1
      %p148 = scmp.ne.s32.totalorder %s143, %s145
      %p149 = scmp.eq.s32.totalorder %s20, 0
      %p150 = por %p148, %p149
      %p151 = scmp.ne.s32.totalorder %s143, %s145
      %p152 = scmp.eq.s32.totalorder %s25, 1
      %p153 = por %p151, %p152
      %p154 = scmp.ne.s32.totalorder %s145, %s146
      %p155 = scmp.eq.s32.totalorder %s25, 0
      %p156 = por %p154, %p155
      %p157 = scmp.ne.s32.totalorder %s145, %s146
      %p158 = scmp.eq.s32.totalorder %s26, 1
      %p159 = por %p157, %p158
      %p161 = scmp.ne.s32.totalorder %s146, %s160
      %p162 = scmp.eq.s32.totalorder %s26, 0
      %p163 = por %p161, %p162
      %s164 = ssub.s32 %s27, %s46
      %s165 = ssub.s32 %s28, %s42
      %s166 = sor.u32 %s164, %s165
      %p167 = scmp.eq.s32.totalorder %s166, 0
      %s169 = sadd.s32 %s168, 1
      %s170 = scalar_select %p167, %s168, %s169
      %p173 = pneg %p167
      %p174 = scmp.eq.s32.totalorder %s20, 1
      %p175 = por %p173, %p174
      %p176 = scmp.ne.s32.totalorder %s168, %s171
      %p177 = scmp.eq.s32.totalorder %s20, 0
      %p178 = por %p176, %p177
      %p179 = scmp.ne.s32.totalorder %s168, %s171
      %p180 = scmp.eq.s32.totalorder %s25, 1
      %p181 = por %p179, %p180
      %p182 = scmp.ne.s32.totalorder %s171, %s172
      %p183 = scmp.eq.s32.totalorder %s25, 0
      %p184 = por %p182, %p183
      %p185 = scmp.ne.s32.totalorder %s171, %s172
      %p186 = scmp.eq.s32.totalorder %s26, 1
      %p187 = por %p185, %p186
      %p189 = scmp.ne.s32.totalorder %s172, %s188
      %p190 = scmp.eq.s32.totalorder %s26, 0
      %p191 = por %p189, %p190
      %p192 = scmp.le.s32.totalorder 1, %s20
      %p193 = scmp.lt.s32.totalorder %s20, 3
      %p194 = pnand %p192, %p193
      %p195 = pneg %p194
      // Predicated region
      $region9: #{tpu_custom_call.1} parent=5 // pred_check
        _
      $region10: #{tpu_custom_call.1} parent=5 // pred_check_branch
        %197 = sbr.rel (%p194) target = $region12
      $region11: #{tpu_custom_call.1} parent=5 // pred_region
        %s198 = ssub.s32 %s20, 1
        // Predicated region
        $region13: #{tpu_custom_call.1} parent=11 // pred_check
          %p199 = pneg %p114
        $region14: #{tpu_custom_call.1} parent=11 // pred_check_branch
          %201 = sbr.rel (%p199) target = $region16
        $region15: #{tpu_custom_call.1} parent=11 // pred_region
          _
        $region16: #{tpu_custom_call.1} parent=11 // pred_fallthru
          _
        // Predicated region
        $region17: #{tpu_custom_call.1} parent=11 // pred_check
          %p202 = pneg %p135
        $region18: #{tpu_custom_call.1} parent=11 // pred_check_branch
          %204 = sbr.rel (%p202) target = $region20
        $region19: #{tpu_custom_call.1} parent=11 // pred_region
          _
        $region20: #{tpu_custom_call.1} parent=11 // pred_fallthru
          _
        // Predicated region
        $region21: #{tpu_custom_call.1} parent=11 // pred_check
          %p205 = pneg %p156
        $region22: #{tpu_custom_call.1} parent=11 // pred_check_branch
          %207 = sbr.rel (%p205) target = $region24
        $region23: #{tpu_custom_call.1} parent=11 // pred_region
          _
        $region24: #{tpu_custom_call.1} parent=11 // pred_fallthru
          _
      $region12: #{tpu_custom_call.1} parent=5 // pred_fallthru
        _
      %p208 = scmp.lt.s32.totalorder %s20, 2
      // Predicated region
      $region25: #{tpu_custom_call.1} parent=5 // pred_check
        %p209 = pneg %p208
      $region26: #{tpu_custom_call.1} parent=5 // pred_check_branch
        %211 = sbr.rel (%p209) target = $region28
      $region27: #{tpu_custom_call.1} parent=5 // pred_region
        // Predicated region
        $region29: #{tpu_custom_call.1} parent=27 // pred_check
          %p212 = pneg %p61
        $region30: #{tpu_custom_call.1} parent=27 // pred_check_branch
          %214 = sbr.rel (%p212) target = $region32
        $region31: #{tpu_custom_call.1} parent=27 // pred_region
          %s215 = sand.u32 %s51, 1
          %s216 = scalar_lea.sflag [#allocation7], %s215
          %s217 = sand.u32 %s51, 1
          %s218 = smul.addr %s217, 32
          %s219 = scalar_lea.vmem [#allocation6], %s218
          %s220 = smul.u32 2, %s28
          %s222 = ssub.s32 512, 512
          %223 = vsyncadd %s216, %s222
          %s224 = smul.addr %s27, 4
          %s225 = sadd.s32 %s220, %s224
          %s226 = smul.addr %s225, 128
          %s227 = scalar_lea.hbm %s0, %s226
          %s228 = sshll.u32 %s219, 4
          %s229 = int_to_ptr.vmem [resolvable:$true] %s228
          %234 = dma.hbm_to_vmem [thread:$0]  %s227, 512, %s229, %s216, 256, 256, 16
        $region32: #{tpu_custom_call.1} parent=27 // pred_fallthru
          _
        // Predicated region
        $region33: #{tpu_custom_call.1} parent=27 // pred_check
          %p235 = pneg %p87
        $region34: #{tpu_custom_call.1} parent=27 // pred_check_branch
          %237 = sbr.rel (%p235) target = $region36
        $region35: #{tpu_custom_call.1} parent=27 // pred_region
          %s238 = sand.u32 %s77, 1
          %s239 = scalar_lea.sflag [#allocation10], %s238
          %s240 = sand.u32 %s77, 1
          %s241 = smul.addr %s240, 32
          %s242 = scalar_lea.vmem [#allocation9], %s241
          %s244 = ssub.s32 512, 512
          %245 = vsyncadd %s239, %s244
          %s246 = smul.addr %s27, 4
          %s247 = smul.addr %s246, 128
          %s248 = scalar_lea.hbm %s1, %s247
          %s249 = sshll.u32 %s242, 4
          %s250 = int_to_ptr.vmem [resolvable:$true] %s249
          %255 = dma.hbm_to_vmem [thread:$0]  %s248, 512, %s250, %s239, 256, 256, 16
        $region36: #{tpu_custom_call.1} parent=27 // pred_fallthru
          _
      $region28: #{tpu_custom_call.1} parent=5 // pred_fallthru
        _
      %p256 = scmp.le.s32.totalorder 1, %s20
      %p257 = scmp.lt.s32.totalorder %s20, 3
      %p258 = pnand %p256, %p257
      %p259 = pneg %p258
      // Predicated region
      $region37: #{tpu_custom_call.1} parent=5 // pred_check
        _
      $region38: #{tpu_custom_call.1} parent=5 // pred_check_branch
        %261 = sbr.rel (%p258) target = $region40
      $region39: #{tpu_custom_call.1} parent=5 // pred_region
        %s262 = ssub.s32 %s20, 1
        %s263 = sand.u32 %s54, 1
        %s264 = scalar_lea.sflag [#allocation7], %s263
        %s265 = sand.u32 %s54, 1
        %s266 = smul.addr %s265, 32
        %s267 = scalar_lea.vmem [#allocation6], %s266
        // Predicated region
        $region41: #{tpu_custom_call.1} parent=39 // pred_check
          %p268 = pneg %p67
        $region42: #{tpu_custom_call.1} parent=39 // pred_check_branch
          %270 = sbr.rel (%p268) target = $region44
        $region43: #{tpu_custom_call.1} parent=39 // pred_region
          %271 = dma.done %s264, 512
        $region44: #{tpu_custom_call.1} parent=39 // pred_fallthru
          _
        %s272 = sand.u32 %s80, 1
        %s273 = scalar_lea.sflag [#allocation10], %s272
        %s274 = sand.u32 %s80, 1
        %s275 = smul.addr %s274, 32
        %s276 = scalar_lea.vmem [#allocation9], %s275
        // Predicated region
        $region45: #{tpu_custom_call.1} parent=39 // pred_check
          %p277 = pneg %p93
        $region46: #{tpu_custom_call.1} parent=39 // pred_check_branch
          %279 = sbr.rel (%p277) target = $region48
        $region47: #{tpu_custom_call.1} parent=39 // pred_region
          %280 = dma.done %s273, 512
        $region48: #{tpu_custom_call.1} parent=39 // pred_fallthru
          _
        %s281 = sand.u32 %s54, 1
        %s282 = scalar_lea.sflag [#allocation7], %s281
        %s283 = sand.u32 %s54, 1
        %s284 = smul.addr %s283, 32
        %s285 = scalar_lea.vmem [#allocation6], %s284
        %p286 = pneg %p67
        %p287 = pneg %p64
        %s288 = sand.u32 %s80, 1
        %s289 = scalar_lea.sflag [#allocation10], %s288
        %s290 = sand.u32 %s80, 1
        %s291 = smul.addr %s290, 32
        %s292 = scalar_lea.vmem [#allocation9], %s291
        %p293 = pneg %p93
        %p294 = pneg %p90
        %p295 = pneg %p114
        %p296 = pneg %p111
        %p297 = pneg %p135
        %p298 = pneg %p132
        %p299 = pneg %p156
        %p300 = pneg %p153
        %p301 = pneg %p184
        %p302 = pneg %p181
        %s303 = sand.u32 %s171, 1
        %s304 = scalar_lea.sflag [#allocation8], %s303
        %s305 = sand.u32 %s171, 1
        %s306 = smul.addr %s305, 32
        %s307 = scalar_lea.vmem [#allocation11], %s306
        %s308 = smul.u32 2, %s31
        %s309 = smul.u32 2, %s31
        %p310 = scmp.eq.s32.totalorder %s32, 0
        // Predicated region
        $region49: #{tpu_custom_call.1} parent=39 // pred_check
          %p311 = pneg %p310
        $region50: #{tpu_custom_call.1} parent=39 // pred_check_branch
          %313 = sbr.rel (%p311) target = $region52
        $region51: #{tpu_custom_call.1} parent=39 // pred_region
          %v314 = vlaneseq
          %vm315 = vcmp.ge.s32.totalorder %v314, 0
          %vm316 = vcmp.lt.s32.totalorder %v314, 256
          %vm317 = vmand %vm315, %vm316
          %318 = vst.msk [vmem:[#allocation3] sm:$0x3] %vm317, -inf
          %319 = vst.msk [vmem:[#allocation3 + $0x2] sm:$0x3] %vm317, -inf
          %320 = vst.msk [vmem:[#allocation4] sm:$0x3] %vm317, 0.0
          %321 = vst.msk [vmem:[#allocation4 + $0x2] sm:$0x3] %vm317, 0.0
          %322 = vst [vmem:[#allocation5] sm:$0xff] 0.0
          %323 = vst [vmem:[#allocation5 + $0x8] sm:$0xff] 0.0
          %324 = vst [vmem:[#allocation5 + $0x10] sm:$0xff] 0.0
          %325 = vst [vmem:[#allocation5 + $0x18] sm:$0xff] 0.0
          %v326 = vld [vmem:[%s2] sm:$0xff]
          %v327 = vld [vmem:[%s2 + $0x8] sm:$0xff]
          %v328 = vld [vmem:[%s267] sm:$0xff]
          %v329 = vld [vmem:[%s267 + $0x8] sm:$0xff]
          %v330 = vld [vmem:[%s267 + $0x10] sm:$0xff]
          %v331 = vld [vmem:[%s267 + $0x18] sm:$0xff]
          %vm332 = vcmask 130048
          %v334 = vsel %vm332, %v326, 0
          %v337 = vsel %vm332, %v327, 0
          %339 = vmatprep.subr.mxu0 %v329
          %340 = vmatpush1.msra.mxu0 %v328
          %341 = vmatprep.subr.mxu0 %v331
          %342 = vmatpush1.msra.mxu0 %v330
          %343 = vmatprep.subr.mxu0 0.0
          %344 = vmatpush1.msra.mxu0 0.0
          %345 = vmatprep.subr.mxu0 0.0
          %346 = vmatpush1.msra.mxu0 0.0
          %347 = vmatprep.subr.mxu0 0.0
          %348 = vmatpush1.msra.mxu0 0.0
          %349 = vmatprep.subr.mxu0 0.0
          %350 = vmatpush1.msra.mxu0 0.0
          %351 = vmatprep.subr.mxu0 0.0
          %352 = vmatpush1.msra.mxu0 0.0
          %353 = vmatprep.subr.mxu0 0.0
          %354 = vmatpush1.msra.mxu0 0.0
          %355 = vmatprep.subr.mxu0 0.0
          %356 = vmatpush1.msra.mxu0 0.0
          %357 = vmatprep.subr.mxu0 0.0
          %358 = vmatpush1.msra.mxu0 0.0
          %359 = vmatprep.subr.mxu0 0.0
          %360 = vmatpush1.msra.mxu0 0.0
          %361 = vmatprep.subr.mxu0 0.0
          %362 = vmatpush1.msra.mxu0 0.0
          %363 = vmatprep.subr.mxu0 0.0
          %364 = vmatpush1.msra.mxu0 0.0
          %365 = vmatprep.subr.mxu0 0.0
          %366 = vmatpush1.msra.mxu0 0.0
          %367 = vmatprep.subr.mxu0 0.0
          %368 = vmatpush1.msra.mxu0 0.0
          %369 = vmatprep.subr.mxu0 0.0
          %370 = vmatpush1.msra.mxu0 0.0
          %371 = vmatprep.subr.mxu0 0.0
          %372 = vmatpush1.msra.mxu0 0.0
          %373 = vmatprep.subr.mxu0 0.0
          %374 = vmatpush1.msra.mxu0 0.0
          %375 = vmatprep.subr.mxu0 0.0
          %376 = vmatpush1.msra.mxu0 0.0
          %377 = vmatprep.subr.mxu0 0.0
          %378 = vmatpush1.msra.mxu0 0.0
          %379 = vmatprep.subr.mxu0 0.0
          %380 = vmatpush1.msra.mxu0 0.0
          %381 = vmatprep.subr.mxu0 0.0
          %382 = vmatpush1.msra.mxu0 0.0
          %383 = vmatprep.subr.mxu0 0.0
          %384 = vmatpush1.msra.mxu0 0.0
          %385 = vmatprep.subr.mxu0 0.0
          %386 = vmatpush1.msra.mxu0 0.0
          %387 = vmatprep.subr.mxu0 0.0
          %388 = vmatpush1.msra.mxu0 0.0
          %389 = vmatprep.subr.mxu0 0.0
          %390 = vmatpush1.msra.mxu0 0.0
          %391 = vmatprep.subr.mxu0 0.0
          %392 = vmatpush1.msra.mxu0 0.0
          %393 = vmatprep.subr.mxu0 0.0
          %394 = vmatpush1.msra.mxu0 0.0
          %395 = vmatprep.subr.mxu0 0.0
          %396 = vmatpush1.msra.mxu0 0.0
          %397 = vmatprep.subr.mxu0 0.0
          %398 = vmatpush1.msra.mxu0 0.0
          %399 = vmatprep.subr.mxu0 0.0
          %400 = vmatpush1.msra.mxu0 0.0
          %401 = vmatprep.subr.mxu0 0.0
          %402 = vmatpush1.msra.mxu0 0.0
          %403 = vmatprep.mubr.f32.mxu0 0.0
          %404 = vmatmul.mubr.f32.gmra.mrb[0].mxu0 %v334
          %v405 = vpop.f32.mrb[0].mxu0
          %v406 = vadd.f32 0.0, %v405
          %v407 = vpop.f32.mrb[0].mxu0
          %v408 = vadd.f32 0.0, %v407
          %409 = vmatprep.mubr.f32.mxu0 0.0
          %410 = vmatmul.mubr.f32.gmra.mrb[0].mxu0 %v337
          %v411 = vpop.f32.mrb[0].mxu0
          %v412 = vadd.f32 0.0, %v411
          %v413 = vpop.f32.mrb[0].mxu0
          %v414 = vadd.f32 0.0, %v413
          %415 = vdwg.mxu0
          %416 = vst [vmem:[#allocation2] sm:$0xff] %v406
          %417 = vst [vmem:[#allocation2 + $0x8] sm:$0xff] %v408
          %418 = vst [vmem:[#allocation2 + $0x10] sm:$0xff] %v412
          %419 = vst [vmem:[#allocation2 + $0x18] sm:$0xff] %v414
        $region52: #{tpu_custom_call.1} parent=39 // pred_fallthru
          _
        %s420 = smul.u32 %s32, 256
        %s421 = sshra.s32 %s420, 7
        %s422 = sand.u32 %s420, 127
        %s423 = smul.addr %s421, 8
        %s424 = scalar_lea.vmem %s276, %s423 [#allocation9]
        %v425 = vld [vmem:[%s424] sm:$0xff]
        %v426 = vld [vmem:[%s424 + $0x8] sm:$0xff]
        %v427 = vld [vmem:[%s424 + $0x10] sm:$0xff]
        %v428 = vld [vmem:[%s424 + $0x18] sm:$0xff]
        %v429 = vld [vmem:[%s3] sm:$0xff]
        %v430 = vld [vmem:[%s3 + $0x8] sm:$0xff]
        %v431 = vld [vmem:[%s3 + $0x10] sm:$0xff]
        %v432 = vld [vmem:[%s3 + $0x18] sm:$0xff]
        %vm433 = vcmask 130048
        %v435 = vsel %vm433, %v429, 0
        %v438 = vsel %vm433, %v430, 0
        %v441 = vsel %vm433, %v431, 0
        %v444 = vsel %vm433, %v432, 0
        %446 = vmatprep.subr.mxu0 %v426
        %447 = vmatpush1.msra.mxu0 %v425
        %448 = vmatprep.subr.mxu0 %v428
        %449 = vmatpush1.msra.mxu0 %v427
        %450 = vmatprep.subr.mxu0 0.0
        %451 = vmatpush1.msra.mxu0 0.0
        %452 = vmatprep.subr.mxu0 0.0
        %453 = vmatpush1.msra.mxu0 0.0
        %454 = vmatprep.subr.mxu0 0.0
        %455 = vmatpush1.msra.mxu0 0.0
        %456 = vmatprep.subr.mxu0 0.0
        %457 = vmatpush1.msra.mxu0 0.0
        %458 = vmatprep.subr.mxu0 0.0
        %459 = vmatpush1.msra.mxu0 0.0
        %460 = vmatprep.subr.mxu0 0.0
        %461 = vmatpush1.msra.mxu0 0.0
        %462 = vmatprep.subr.mxu0 0.0
        %463 = vmatpush1.msra.mxu0 0.0
        %464 = vmatprep.subr.mxu0 0.0
        %465 = vmatpush1.msra.mxu0 0.0
        %466 = vmatprep.subr.mxu0 0.0
        %467 = vmatpush1.msra.mxu0 0.0
        %468 = vmatprep.subr.mxu0 0.0
        %469 = vmatpush1.msra.mxu0 0.0
        %470 = vmatprep.subr.mxu0 0.0
        %471 = vmatpush1.msra.mxu0 0.0
        %472 = vmatprep.subr.mxu0 0.0
        %473 = vmatpush1.msra.mxu0 0.0
        %474 = vmatprep.subr.mxu0 0.0
        %475 = vmatpush1.msra.mxu0 0.0
        %476 = vmatprep.subr.mxu0 0.0
        %477 = vmatpush1.msra.mxu0 0.0
        %478 = vmatprep.subr.mxu0 0.0
        %479 = vmatpush1.msra.mxu0 0.0
        %480 = vmatprep.subr.mxu0 0.0
        %481 = vmatpush1.msra.mxu0 0.0
        %482 = vmatprep.subr.mxu0 0.0
        %483 = vmatpush1.msra.mxu0 0.0
        %484 = vmatprep.subr.mxu0 0.0
        %485 = vmatpush1.msra.mxu0 0.0
        %486 = vmatprep.subr.mxu0 0.0
        %487 = vmatpush1.msra.mxu0 0.0
        %488 = vmatprep.subr.mxu0 0.0
        %489 = vmatpush1.msra.mxu0 0.0
        %490 = vmatprep.subr.mxu0 0.0
        %491 = vmatpush1.msra.mxu0 0.0
        %492 = vmatprep.subr.mxu0 0.0
        %493 = vmatpush1.msra.mxu0 0.0
        %494 = vmatprep.subr.mxu0 0.0
        %495 = vmatpush1.msra.mxu0 0.0
        %496 = vmatprep.subr.mxu0 0.0
        %497 = vmatpush1.msra.mxu0 0.0
        %498 = vmatprep.subr.mxu0 0.0
        %499 = vmatpush1.msra.mxu0 0.0
        %500 = vmatprep.subr.mxu0 0.0
        %501 = vmatpush1.msra.mxu0 0.0
        %502 = vmatprep.subr.mxu0 0.0
        %503 = vmatpush1.msra.mxu0 0.0
        %504 = vmatprep.subr.mxu0 0.0
        %505 = vmatpush1.msra.mxu0 0.0
        %506 = vmatprep.subr.mxu0 0.0
        %507 = vmatpush1.msra.mxu0 0.0
        %508 = vmatprep.subr.mxu0 0.0
        %509 = vmatpush1.msra.mxu0 0.0
        %510 = vmatprep.mubr.f32.mxu0 0.0
        %511 = vmatmul.mubr.f32.gmra.mrb[0].mxu0 %v435
        %v512 = vpop.f32.mrb[0].mxu0
        %v513 = vadd.f32 0.0, %v512
        %v514 = vpop.f32.mrb[0].mxu0
        %v515 = vadd.f32 0.0, %v514
        %516 = vmatprep.mubr.f32.mxu0 0.0
        %517 = vmatmul.mubr.f32.gmra.mrb[0].mxu0 %v438
        %v518 = vpop.f32.mrb[0].mxu0
        %v519 = vadd.f32 0.0, %v518
        %v520 = vpop.f32.mrb[0].mxu0
        %v521 = vadd.f32 0.0, %v520
        %522 = vmatprep.mubr.f32.mxu0 0.0
        %523 = vmatmul.mubr.f32.gmra.mrb[0].mxu0 %v441
        %v524 = vpop.f32.mrb[0].mxu0
        %v525 = vadd.f32 0.0, %v524
        %v526 = vpop.f32.mrb[0].mxu0
        %v527 = vadd.f32 0.0, %v526
        %528 = vmatprep.mubr.f32.mxu0 0.0
        %529 = vmatmul.mubr.f32.gmra.mrb[0].mxu0 %v444
        %v530 = vpop.f32.mrb[0].mxu0
        %v531 = vadd.f32 0.0, %v530
        %v532 = vpop.f32.mrb[0].mxu0
        %v533 = vadd.f32 0.0, %v532
        %534 = vdwg.mxu0
        %v535 = vld [vmem:[#allocation2] sm:$0xff]
        %v536 = vld [vmem:[#allocation2 + $0x8] sm:$0xff]
        %v537 = vld [vmem:[#allocation2 + $0x10] sm:$0xff]
        %v538 = vld [vmem:[#allocation2 + $0x18] sm:$0xff]
        %539 = vxpose.xlu0.b32.start [1/16] %v513, 128
        %540 = vxpose.xlu0.b32.cont [2/16] 0.0, 128
        %541 = vxpose.xlu0.b32.cont [3/16] 0.0, 128
        %542 = vxpose.xlu0.b32.cont [4/16] 0.0, 128
        %543 = vxpose.xlu0.b32.cont [5/16] 0.0, 128
        %544 = vxpose.xlu0.b32.cont [6/16] 0.0, 128
        %545 = vxpose.xlu0.b32.cont [7/16] 0.0, 128
        %546 = vxpose.xlu0.b32.cont [8/16] 0.0, 128
        %547 = vxpose.xlu0.b32.cont [9/16] 0.0, 128
        %548 = vxpose.xlu0.b32.cont [10/16] 0.0, 128
        %549 = vxpose.xlu0.b32.cont [11/16] 0.0, 128
        %550 = vxpose.xlu0.b32.cont [12/16] 0.0, 128
        %551 = vxpose.xlu0.b32.cont [13/16] 0.0, 128
        %552 = vxpose.xlu0.b32.cont [14/16] 0.0, 128
        %553 = vxpose.xlu0.b32.cont [15/16] 0.0, 128
        %554 = vxpose.xlu0.b32.end [16/16] 0.0, 128
        %v555 = vpop.trf.xlu0
        %v556 = vpop.trf.xlu0
        %v557 = vpop.trf.xlu0
        %v558 = vpop.trf.xlu0
        %v559 = vpop.trf.xlu0
        %v560 = vpop.trf.xlu0
        %v561 = vpop.trf.xlu0
        %v562 = vpop.trf.xlu0
        %v563 = vpop.trf.xlu0
        %v564 = vpop.trf.xlu0
        %v565 = vpop.trf.xlu0
        %v566 = vpop.trf.xlu0
        %v567 = vpop.trf.xlu0
        %v568 = vpop.trf.xlu0
        %v569 = vpop.trf.xlu0
        %v570 = vpop.trf.xlu0
        %571 = vxpose.xlu0.b32.start [1/16] %v515, 128
        %572 = vxpose.xlu0.b32.cont [2/16] 0.0, 128
        %573 = vxpose.xlu0.b32.cont [3/16] 0.0, 128
        %574 = vxpose.xlu0.b32.cont [4/16] 0.0, 128
        %575 = vxpose.xlu0.b32.cont [5/16] 0.0, 128
        %576 = vxpose.xlu0.b32.cont [6/16] 0.0, 128
        %577 = vxpose.xlu0.b32.cont [7/16] 0.0, 128
        %578 = vxpose.xlu0.b32.cont [8/16] 0.0, 128
        %579 = vxpose.xlu0.b32.cont [9/16] 0.0, 128
        %580 = vxpose.xlu0.b32.cont [10/16] 0.0, 128
        %581 = vxpose.xlu0.b32.cont [11/16] 0.0, 128
        %582 = vxpose.xlu0.b32.cont [12/16] 0.0, 128
        %583 = vxpose.xlu0.b32.cont [13/16] 0.0, 128
        %584 = vxpose.xlu0.b32.cont [14/16] 0.0, 128
        %585 = vxpose.xlu0.b32.cont [15/16] 0.0, 128
        %586 = vxpose.xlu0.b32.end [16/16] 0.0, 128
        %v587 = vpop.trf.xlu0
        %v588 = vpop.trf.xlu0
        %v589 = vpop.trf.xlu0
        %v590 = vpop.trf.xlu0
        %v591 = vpop.trf.xlu0
        %v592 = vpop.trf.xlu0
        %v593 = vpop.trf.xlu0
        %v594 = vpop.trf.xlu0
        %v595 = vpop.trf.xlu0
        %v596 = vpop.trf.xlu0
        %v597 = vpop.trf.xlu0
        %v598 = vpop.trf.xlu0
        %v599 = vpop.trf.xlu0
        %v600 = vpop.trf.xlu0
        %v601 = vpop.trf.xlu0
        %v602 = vpop.trf.xlu0
        %vm603 = vcmask 64512
        %v605 = vsel %vm603, %v555, 0
        %v608 = vsel %vm603, %v556, 0
        %v611 = vsel %vm603, %v557, 0
        %v614 = vsel %vm603, %v558, 0
        %v617 = vsel %vm603, %v559, 0
        %v620 = vsel %vm603, %v560, 0
        %v623 = vsel %vm603, %v561, 0
        %v626 = vsel %vm603, %v562, 0
        %v629 = vsel %vm603, %v563, 0
        %v632 = vsel %vm603, %v564, 0
        %v635 = vsel %vm603, %v565, 0
        %v638 = vsel %vm603, %v566, 0
        %v641 = vsel %vm603, %v567, 0
        %v644 = vsel %vm603, %v568, 0
        %v647 = vsel %vm603, %v569, 0
        %v650 = vsel %vm603, %v570, 0
        %v653 = vsel %vm603, %v587, 0
        %v656 = vsel %vm603, %v588, 0
        %v659 = vsel %vm603, %v589, 0
        %v662 = vsel %vm603, %v590, 0
        %v665 = vsel %vm603, %v591, 0
        %v668 = vsel %vm603, %v592, 0
        %v671 = vsel %vm603, %v593, 0
        %v674 = vsel %vm603, %v594, 0
        %v677 = vsel %vm603, %v595, 0
        %v680 = vsel %vm603, %v596, 0
        %v683 = vsel %vm603, %v597, 0
        %v686 = vsel %vm603, %v598, 0
        %v689 = vsel %vm603, %v599, 0
        %v692 = vsel %vm603, %v600, 0
        %v695 = vsel %vm603, %v601, 0
        %v698 = vsel %vm603, %v602, 0
        %700 = vmatprep.subr.mxu0 %v536
        %701 = vmatpush1.msra.mxu0 %v535
        %702 = vmatprep.subr.mxu0 0.0
        %703 = vmatpush1.msra.mxu0 0.0
        %704 = vmatprep.subr.mxu0 0.0
        %705 = vmatpush1.msra.mxu0 0.0
        %706 = vmatprep.subr.mxu0 0.0
        %707 = vmatpush1.msra.mxu0 0.0
        %708 = vmatprep.subr.mxu0 0.0
        %709 = vmatpush1.msra.mxu0 0.0
        %710 = vmatprep.subr.mxu0 0.0
        %711 = vmatpush1.msra.mxu0 0.0
        %712 = vmatprep.subr.mxu0 0.0
        %713 = vmatpush1.msra.mxu0 0.0
        %714 = vmatprep.subr.mxu0 0.0
        %715 = vmatpush1.msra.mxu0 0.0
        %716 = vmatprep.subr.mxu0 0.0
        %717 = vmatpush1.msra.mxu0 0.0
        %718 = vmatprep.subr.mxu0 0.0
        %719 = vmatpush1.msra.mxu0 0.0
        %720 = vmatprep.subr.mxu0 0.0
        %721 = vmatpush1.msra.mxu0 0.0
        %722 = vmatprep.subr.mxu0 0.0
        %723 = vmatpush1.msra.mxu0 0.0
        %724 = vmatprep.subr.mxu0 0.0
        %725 = vmatpush1.msra.mxu0 0.0
        %726 = vmatprep.subr.mxu0 0.0
        %727 = vmatpush1.msra.mxu0 0.0
        %728 = vmatprep.subr.mxu0 0.0
        %729 = vmatpush1.msra.mxu0 0.0
        %730 = vmatprep.subr.mxu0 0.0
        %731 = vmatpush1.msra.mxu0 0.0
        %732 = vmatprep.subr.mxu0 0.0
        %733 = vmatpush1.msra.mxu0 0.0
        %734 = vmatprep.subr.mxu0 0.0
        %735 = vmatpush1.msra.mxu0 0.0
        %736 = vmatprep.subr.mxu0 0.0
        %737 = vmatpush1.msra.mxu0 0.0
        %738 = vmatprep.subr.mxu0 0.0
        %739 = vmatpush1.msra.mxu0 0.0
        %740 = vmatprep.subr.mxu0 0.0
        %741 = vmatpush1.msra.mxu0 0.0
        %742 = vmatprep.subr.mxu0 0.0
        %743 = vmatpush1.msra.mxu0 0.0
        %744 = vmatprep.subr.mxu0 0.0
        %745 = vmatpush1.msra.mxu0 0.0
        %746 = vmatprep.subr.mxu0 0.0
        %747 = vmatpush1.msra.mxu0 0.0
        %748 = vmatprep.subr.mxu0 0.0
        %749 = vmatpush1.msra.mxu0 0.0
        %750 = vmatprep.subr.mxu0 0.0
        %751 = vmatpush1.msra.mxu0 0.0
        %752 = vmatprep.subr.mxu0 0.0
        %753 = vmatpush1.msra.mxu0 0.0
        %754 = vmatprep.subr.mxu0 0.0
        %755 = vmatpush1.msra.mxu0 0.0
        %756 = vmatprep.subr.mxu0 0.0
        %757 = vmatpush1.msra.mxu0 0.0
        %758 = vmatprep.subr.mxu0 0.0
        %759 = vmatpush1.msra.mxu0 0.0
        %760 = vmatprep.subr.mxu0 0.0
        %761 = vmatpush1.msra.mxu0 0.0
        %762 = vmatprep.subr.mxu0 0.0
        %763 = vmatpush1.msra.mxu0 0.0
        %764 = vmatprep.mubr.f32.mxu0 0.0
        %765 = vmatmul.mubr.f32.gmra.mrb[0].mxu0 %v605
        %v766 = vpop.f32.mrb[0].mxu0
        %v767 = vadd.f32 0.0, %v766
        %v768 = vpop.f32.mrb[0].mxu0
        %v769 = vadd.f32 0.0, %v768
        %770 = vmatprep.mubr.f32.mxu0 0.0
        %771 = vmatmul.mubr.f32.gmra.mrb[0].mxu0 %v608
        %v772 = vpop.f32.mrb[0].mxu0
        %v773 = vadd.f32 0.0, %v772
        %v774 = vpop.f32.mrb[0].mxu0
        %v775 = vadd.f32 0.0, %v774
        %776 = vmatprep.mubr.f32.mxu0 0.0
        %777 = vmatmul.mubr.f32.gmra.mrb[0].mxu0 %v611
        %v778 = vpop.f32.mrb[0].mxu0
        %v779 = vadd.f32 0.0, %v778
        %v780 = vpop.f32.mrb[0].mxu0
        %v781 = vadd.f32 0.0, %v780
        %782 = vmatprep.mubr.f32.mxu0 0.0
        %783 = vmatmul.mubr.f32.gmra.mrb[0].mxu0 %v614
        %v784 = vpop.f32.mrb[0].mxu0
        %v785 = vadd.f32 0.0, %v784
        %v786 = vpop.f32.mrb[0].mxu0
        %v787 = vadd.f32 0.0, %v786
        %788 = vmatprep.mubr.f32.mxu0 0.0
        %789 = vmatmul.mubr.f32.gmra.mrb[0].mxu0 %v617
        %v790 = vpop.f32.mrb[0].mxu0
        %v791 = vadd.f32 0.0, %v790
        %v792 = vpop.f32.mrb[0].mxu0
        %v793 = vadd.f32 0.0, %v792
        %794 = vmatprep.mubr.f32.mxu0 0.0
        %795 = vmatmul.mubr.f32.gmra.mrb[0].mxu0 %v620
        %v796 = vpop.f32.mrb[0].mxu0
        %v797 = vadd.f32 0.0, %v796
        %v798 = vpop.f32.mrb[0].mxu0
        %v799 = vadd.f32 0.0, %v798
        %800 = vmatprep.mubr.f32.mxu0 0.0
        %801 = vmatmul.mubr.f32.gmra.mrb[0].mxu0 %v623
        %v802 = vpop.f32.mrb[0].mxu0
        %v803 = vadd.f32 0.0, %v802
        %v804 = vpop.f32.mrb[0].mxu0
        %v805 = vadd.f32 0.0, %v804
        %806 = vmatprep.mubr.f32.mxu0 0.0
        %807 = vmatmul.mubr.f32.gmra.mrb[0].mxu0 %v626
        %v808 = vpop.f32.mrb[0].mxu0
        %v809 = vadd.f32 0.0, %v808
        %v810 = vpop.f32.mrb[0].mxu0
        %v811 = vadd.f32 0.0, %v810
        %812 = vmatprep.mubr.f32.mxu0 0.0
        %813 = vmatmul.mubr.f32.gmra.mrb[0].mxu0 %v629
        %v814 = vpop.f32.mrb[0].mxu0
        %v815 = vadd.f32 0.0, %v814
        %v816 = vpop.f32.mrb[0].mxu0
        %v817 = vadd.f32 0.0, %v816
        %818 = vmatprep.mubr.f32.mxu0 0.0
        %819 = vmatmul.mubr.f32.gmra.mrb[0].mxu0 %v632
        %v820 = vpop.f32.mrb[0].mxu0
        %v821 = vadd.f32 0.0, %v820
        %v822 = vpop.f32.mrb[0].mxu0
        %v823 = vadd.f32 0.0, %v822
        %824 = vmatprep.mubr.f32.mxu0 0.0
        %825 = vmatmul.mubr.f32.gmra.mrb[0].mxu0 %v635
        %v826 = vpop.f32.mrb[0].mxu0
        %v827 = vadd.f32 0.0, %v826
        %v828 = vpop.f32.mrb[0].mxu0
        %v829 = vadd.f32 0.0, %v828
        %830 = vmatprep.mubr.f32.mxu0 0.0
        %831 = vmatmul.mubr.f32.gmra.mrb[0].mxu0 %v638
        %v832 = vpop.f32.mrb[0].mxu0
        %v833 = vadd.f32 0.0, %v832
        %v834 = vpop.f32.mrb[0].mxu0
        %v835 = vadd.f32 0.0, %v834
        %836 = vmatprep.mubr.f32.mxu0 0.0
        %837 = vmatmul.mubr.f32.gmra.mrb[0].mxu0 %v641
        %v838 = vpop.f32.mrb[0].mxu0
        %v839 = vadd.f32 0.0, %v838
        %v840 = vpop.f32.mrb[0].mxu0
        %v841 = vadd.f32 0.0, %v840
        %842 = vmatprep.mubr.f32.mxu0 0.0
        %843 = vmatmul.mubr.f32.gmra.mrb[0].mxu0 %v644
        %v844 = vpop.f32.mrb[0].mxu0
        %v845 = vadd.f32 0.0, %v844
        %v846 = vpop.f32.mrb[0].mxu0
        %v847 = vadd.f32 0.0, %v846
        %848 = vmatprep.mubr.f32.mxu0 0.0
        %849 = vmatmul.mubr.f32.gmra.mrb[0].mxu0 %v647
        %v850 = vpop.f32.mrb[0].mxu0
        %v851 = vadd.f32 0.0, %v850
        %v852 = vpop.f32.mrb[0].mxu0
        %v853 = vadd.f32 0.0, %v852
        %854 = vmatprep.mubr.f32.mxu0 0.0
        %855 = vmatmul.mubr.f32.gmra.mrb[0].mxu0 %v650
        %v856 = vpop.f32.mrb[0].mxu0
        %v857 = vadd.f32 0.0, %v856
        %v858 = vpop.f32.mrb[0].mxu0
        %v859 = vadd.f32 0.0, %v858
        %860 = vmatprep.mubr.f32.mxu0 0.0
        %861 = vmatmul.mubr.f32.gmra.mrb[0].mxu0 %v653
        %v862 = vpop.f32.mrb[0].mxu0
        %v863 = vadd.f32 0.0, %v862
        %v864 = vpop.f32.mrb[0].mxu0
        %v865 = vadd.f32 0.0, %v864
        %866 = vmatprep.mubr.f32.mxu0 0.0
        %867 = vmatmul.mubr.f32.gmra.mrb[0].mxu0 %v656
        %v868 = vpop.f32.mrb[0].mxu0
        %v869 = vadd.f32 0.0, %v868
        %v870 = vpop.f32.mrb[0].mxu0
        %v871 = vadd.f32 0.0, %v870
        %872 = vmatprep.mubr.f32.mxu0 0.0
        %873 = vmatmul.mubr.f32.gmra.mrb[0].mxu0 %v659
        %v874 = vpop.f32.mrb[0].mxu0
        %v875 = vadd.f32 0.0, %v874
        %v876 = vpop.f32.mrb[0].mxu0
        %v877 = vadd.f32 0.0, %v876
        %878 = vmatprep.mubr.f32.mxu0 0.0
        %879 = vmatmul.mubr.f32.gmra.mrb[0].mxu0 %v662
        %v880 = vpop.f32.mrb[0].mxu0
        %v881 = vadd.f32 0.0, %v880
        %v882 = vpop.f32.mrb[0].mxu0
        %v883 = vadd.f32 0.0, %v882
        %884 = vmatprep.mubr.f32.mxu0 0.0
        %885 = vmatmul.mubr.f32.gmra.mrb[0].mxu0 %v665
        %v886 = vpop.f32.mrb[0].mxu0
        %v887 = vadd.f32 0.0, %v886
        %v888 = vpop.f32.mrb[0].mxu0
        %v889 = vadd.f32 0.0, %v888
        %890 = vmatprep.mubr.f32.mxu0 0.0
        %891 = vmatmul.mubr.f32.gmra.mrb[0].mxu0 %v668
        %v892 = vpop.f32.mrb[0].mxu0
        %v893 = vadd.f32 0.0, %v892
        %v894 = vpop.f32.mrb[0].mxu0
        %v895 = vadd.f32 0.0, %v894
        %896 = vmatprep.mubr.f32.mxu0 0.0
        %897 = vmatmul.mubr.f32.gmra.mrb[0].mxu0 %v671
        %v898 = vpop.f32.mrb[0].mxu0
        %v899 = vadd.f32 0.0, %v898
        %v900 = vpop.f32.mrb[0].mxu0
        %v901 = vadd.f32 0.0, %v900
        %902 = vmatprep.mubr.f32.mxu0 0.0
        %903 = vmatmul.mubr.f32.gmra.mrb[0].mxu0 %v674
        %v904 = vpop.f32.mrb[0].mxu0
        %v905 = vadd.f32 0.0, %v904
        %v906 = vpop.f32.mrb[0].mxu0
        %v907 = vadd.f32 0.0, %v906
        %908 = vmatprep.mubr.f32.mxu0 0.0
        %909 = vmatmul.mubr.f32.gmra.mrb[0].mxu0 %v677
        %v910 = vpop.f32.mrb[0].mxu0
        %v911 = vadd.f32 0.0, %v910
        %v912 = vpop.f32.mrb[0].mxu0
        %v913 = vadd.f32 0.0, %v912
        %914 = vmatprep.mubr.f32.mxu0 0.0
        %915 = vmatmul.mubr.f32.gmra.mrb[0].mxu0 %v680
        %v916 = vpop.f32.mrb[0].mxu0
        %v917 = vadd.f32 0.0, %v916
        %v918 = vpop.f32.mrb[0].mxu0
        %v919 = vadd.f32 0.0, %v918
        %920 = vmatprep.mubr.f32.mxu0 0.0
        %921 = vmatmul.mubr.f32.gmra.mrb[0].mxu0 %v683
        %v922 = vpop.f32.mrb[0].mxu0
        %v923 = vadd.f32 0.0, %v922
        %v924 = vpop.f32.mrb[0].mxu0
        %v925 = vadd.f32 0.0, %v924
        %926 = vmatprep.mubr.f32.mxu0 0.0
        %927 = vmatmul.mubr.f32.gmra.mrb[0].mxu0 %v686
        %v928 = vpop.f32.mrb[0].mxu0
        %v929 = vadd.f32 0.0, %v928
        %v930 = vpop.f32.mrb[0].mxu0
        %v931 = vadd.f32 0.0, %v930
        %932 = vmatprep.mubr.f32.mxu0 0.0
        %933 = vmatmul.mubr.f32.gmra.mrb[0].mxu0 %v689
        %v934 = vpop.f32.mrb[0].mxu0
        %v935 = vadd.f32 0.0, %v934
        %v936 = vpop.f32.mrb[0].mxu0
        %v937 = vadd.f32 0.0, %v936
        %938 = vmatprep.mubr.f32.mxu0 0.0
        %939 = vmatmul.mubr.f32.gmra.mrb[0].mxu0 %v692
        %v940 = vpop.f32.mrb[0].mxu0
        %v941 = vadd.f32 0.0, %v940
        %v942 = vpop.f32.mrb[0].mxu0
        %v943 = vadd.f32 0.0, %v942
        %944 = vmatprep.mubr.f32.mxu0 0.0
        %945 = vmatmul.mubr.f32.gmra.mrb[0].mxu0 %v695
        %v946 = vpop.f32.mrb[0].mxu0
        %v947 = vadd.f32 0.0, %v946
        %v948 = vpop.f32.mrb[0].mxu0
        %v949 = vadd.f32 0.0, %v948
        %950 = vmatprep.mubr.f32.mxu0 0.0
        %951 = vmatmul.mubr.f32.gmra.mrb[0].mxu0 %v698
        %v952 = vpop.f32.mrb[0].mxu0
        %v953 = vadd.f32 0.0, %v952
        %v954 = vpop.f32.mrb[0].mxu0
        %v955 = vadd.f32 0.0, %v954
        %956 = vdwg.mxu0
        %v957 = vld [vmem:[#allocation3] sm:$0x3]
        %v958 = vmax.f32 %v767, %v779
        %v959 = vmax.f32 %v773, %v785
        %v960 = vmax.f32 %v958, %v791
        %v961 = vmax.f32 %v959, %v797
        %v962 = vmax.f32 %v960, %v803
        %v963 = vmax.f32 %v961, %v809
        %v964 = vmax.f32 %v962, %v815
        %v965 = vmax.f32 %v963, %v821
        %v966 = vmax.f32 %v964, %v827
        %v967 = vmax.f32 %v965, %v833
        %v968 = vmax.f32 %v966, %v839
        %v969 = vmax.f32 %v967, %v845
        %v970 = vmax.f32 %v968, %v851
        %v971 = vmax.f32 %v969, %v857
        %v972 = vmax.f32 %v970, %v863
        %v973 = vmax.f32 %v971, %v869
        %v974 = vmax.f32 %v972, %v875
        %v975 = vmax.f32 %v973, %v881
        %v976 = vmax.f32 %v974, %v887
        %v977 = vmax.f32 %v975, %v893
        %v978 = vmax.f32 %v976, %v899
        %v979 = vmax.f32 %v977, %v905
        %v980 = vmax.f32 %v978, %v911
        %v981 = vmax.f32 %v979, %v917
        %v982 = vmax.f32 %v980, %v923
        %v983 = vmax.f32 %v981, %v929
        %v984 = vmax.f32 %v982, %v935
        %v985 = vmax.f32 %v983, %v941
        %v986 = vmax.f32 %v984, %v947
        %v987 = vmax.f32 %v985, %v953
        %v988 = vmax.f32 %v986, %v987
        %v989 = vrot.slane %v988, 4
        %v990 = vmax.f32 %v988, %v989
        %v991 = vrot.slane %v990, 2
        %v992 = vmax.f32 %v990, %v991
        %v993 = vrot.slane %v992, 1
        %v994 = vmax.f32 %v992, %v993
        %v995 = vmax.f32 %v769, %v781
        %v996 = vmax.f32 %v775, %v787
        %v997 = vmax.f32 %v995, %v793
        %v998 = vmax.f32 %v996, %v799
        %v999 = vmax.f32 %v997, %v805
        %v1000 = vmax.f32 %v998, %v811
        %v1001 = vmax.f32 %v999, %v817
        %v1002 = vmax.f32 %v1000, %v823
        %v1003 = vmax.f32 %v1001, %v829
        %v1004 = vmax.f32 %v1002, %v835
        %v1005 = vmax.f32 %v1003, %v841
        %v1006 = vmax.f32 %v1004, %v847
        %v1007 = vmax.f32 %v1005, %v853
        %v1008 = vmax.f32 %v1006, %v859
        %v1009 = vmax.f32 %v1007, %v865
        %v1010 = vmax.f32 %v1008, %v871
        %v1011 = vmax.f32 %v1009, %v877
        %v1012 = vmax.f32 %v1010, %v883
        %v1013 = vmax.f32 %v1011, %v889
        %v1014 = vmax.f32 %v1012, %v895
        %v1015 = vmax.f32 %v1013, %v901
        %v1016 = vmax.f32 %v1014, %v907
        %v1017 = vmax.f32 %v1015, %v913
        %v1018 = vmax.f32 %v1016, %v919
        %v1019 = vmax.f32 %v1017, %v925
        %v1020 = vmax.f32 %v1018, %v931
        %v1021 = vmax.f32 %v1019, %v937
        %v1022 = vmax.f32 %v1020, %v943
        %v1023 = vmax.f32 %v1021, %v949
        %v1024 = vmax.f32 %v1022, %v955
        %v1025 = vmax.f32 %v1023, %v1024
        %v1026 = vrot.slane %v1025, 4
        %v1027 = vmax.f32 %v1025, %v1026
        %v1028 = vrot.slane %v1027, 2
        %v1029 = vmax.f32 %v1027, %v1028
        %v1030 = vrot.slane %v1029, 1
        %v1031 = vmax.f32 %v1029, %v1030
        %v1034 = vcombine.low %v994, %v1031
        %v1036 = vunpack.c.l.s4 1966171168
        %v1037 = vunpack.c.0.s8 %v1036
        %v1038 = vlaneseq
        %v1039 = vshrl.u32 %v1038, 7
        %v1040 = vsub.s32 %v1037, %v1039
        %v1041 = vrot.slane %v1034, %v1040
        %v1043 = vunpack.c.l.s4 1966171168
        %v1044 = vunpack.c.0.s8 %v1043
        %v1045 = vlaneseq
        %v1046 = vshrl.u32 %v1045, 7
        %v1047 = vsub.s32 %v1044, %v1046
        %v1048 = vrot.slane %v1041, %v1047
        %v1050 = vmax.f32 %v957, %v1048
        %v1051 = vsub.f32 %v957, %v1050
        %v1052 = vmul.f32 %v1051, 1.442695
        %v1053 = vpow.pop %v1052
        %v1055 = vlaneseq
        %v1056 = vshrl.u32 %v1055, 7
        %v1057 = vsub.s32 0, %v1056
        %v1058 = vrot.slane %v1050, %v1057
        %v1059 = vlaneseq
        %v1060 = vshrl.u32 %v1059, 7
        %v1061 = vsub.s32 1, %v1060
        %v1062 = vrot.slane %v1050, %v1061
        %v1065 = vsub.f32 %v767, %v1058
        %v1066 = vsub.f32 %v769, %v1062
        %v1067 = vsub.f32 %v773, %v1058
        %v1068 = vsub.f32 %v775, %v1062
        %v1069 = vsub.f32 %v779, %v1058
        %v1070 = vsub.f32 %v781, %v1062
        %v1071 = vsub.f32 %v785, %v1058
        %v1072 = vsub.f32 %v787, %v1062
        %v1073 = vsub.f32 %v791, %v1058
        %v1074 = vsub.f32 %v793, %v1062
        %v1075 = vsub.f32 %v797, %v1058
        %v1076 = vsub.f32 %v799, %v1062
        %v1077 = vsub.f32 %v803, %v1058
        %v1078 = vsub.f32 %v805, %v1062
        %v1079 = vsub.f32 %v809, %v1058
        %v1080 = vsub.f32 %v811, %v1062
        %v1081 = vsub.f32 %v815, %v1058
        %v1082 = vsub.f32 %v817, %v1062
        %v1083 = vsub.f32 %v821, %v1058
        %v1084 = vsub.f32 %v823, %v1062
        %v1085 = vsub.f32 %v827, %v1058
        %v1086 = vsub.f32 %v829, %v1062
        %v1087 = vsub.f32 %v833, %v1058
        %v1088 = vsub.f32 %v835, %v1062
        %v1089 = vsub.f32 %v839, %v1058
        %v1090 = vsub.f32 %v841, %v1062
        %v1091 = vsub.f32 %v845, %v1058
        %v1092 = vsub.f32 %v847, %v1062
        %v1093 = vsub.f32 %v851, %v1058
        %v1094 = vsub.f32 %v853, %v1062
        %v1095 = vsub.f32 %v857, %v1058
        %v1096 = vsub.f32 %v859, %v1062
        %v1097 = vsub.f32 %v863, %v1058
        %v1098 = vsub.f32 %v865, %v1062
        %v1099 = vsub.f32 %v869, %v1058
        %v1100 = vsub.f32 %v871, %v1062
        %v1101 = vsub.f32 %v875, %v1058
        %v1102 = vsub.f32 %v877, %v1062
        %v1103 = vsub.f32 %v881, %v1058
        %v1104 = vsub.f32 %v883, %v1062
        %v1105 = vsub.f32 %v887, %v1058
        %v1106 = vsub.f32 %v889, %v1062
        %v1107 = vsub.f32 %v893, %v1058
        %v1108 = vsub.f32 %v895, %v1062
        %v1109 = vsub.f32 %v899, %v1058
        %v1110 = vsub.f32 %v901, %v1062
        %v1111 = vsub.f32 %v905, %v1058
        %v1112 = vsub.f32 %v907, %v1062
        %v1113 = vsub.f32 %v911, %v1058
        %v1114 = vsub.f32 %v913, %v1062
        %v1115 = vsub.f32 %v917, %v1058
        %v1116 = vsub.f32 %v919, %v1062
        %v1117 = vsub.f32 %v923, %v1058
        %v1118 = vsub.f32 %v925, %v1062
        %v1119 = vsub.f32 %v929, %v1058
        %v1120 = vsub.f32 %v931, %v1062
        %v1121 = vsub.f32 %v935, %v1058
        %v1122 = vsub.f32 %v937, %v1062
        %v1123 = vsub.f32 %v941, %v1058
        %v1124 = vsub.f32 %v943, %v1062
        %v1125 = vsub.f32 %v947, %v1058
        %v1126 = vsub.f32 %v949, %v1062
        %v1127 = vsub.f32 %v953, %v1058
        %v1128 = vsub.f32 %v955, %v1062
        %v1129 = vmul.f32 %v1065, 1.442695
        %v1130 = vpow.pop %v1129
        %v1131 = vmul.f32 %v1066, 1.442695
        %v1132 = vpow.pop %v1131
        %v1133 = vmul.f32 %v1067, 1.442695
        %v1134 = vpow.pop %v1133
        %v1135 = vmul.f32 %v1068, 1.442695
        %v1136 = vpow.pop %v1135
        %v1137 = vmul.f32 %v1069, 1.442695
        %v1138 = vpow.pop %v1137
        %v1139 = vmul.f32 %v1070, 1.442695
        %v1140 = vpow.pop %v1139
        %v1141 = vmul.f32 %v1071, 1.442695
        %v1142 = vpow.pop %v1141
        %v1143 = vmul.f32 %v1072, 1.442695
        %v1144 = vpow.pop %v1143
        %v1145 = vmul.f32 %v1073, 1.442695
        %v1146 = vpow.pop %v1145
        %v1147 = vmul.f32 %v1074, 1.442695
        %v1148 = vpow.pop %v1147
        %v1149 = vmul.f32 %v1075, 1.442695
        %v1150 = vpow.pop %v1149
        %v1151 = vmul.f32 %v1076, 1.442695
        %v1152 = vpow.pop %v1151
        %v1153 = vmul.f32 %v1077, 1.442695
        %v1154 = vpow.pop %v1153
        %v1155 = vmul.f32 %v1078, 1.442695
        %v1156 = vpow.pop %v1155
        %v1157 = vmul.f32 %v1079, 1.442695
        %v1158 = vpow.pop %v1157
        %v1159 = vmul.f32 %v1080, 1.442695
        %v1160 = vpow.pop %v1159
        %v1161 = vmul.f32 %v1081, 1.442695
        %v1162 = vpow.pop %v1161
        %v1163 = vmul.f32 %v1082, 1.442695
        %v1164 = vpow.pop %v1163
        %v1165 = vmul.f32 %v1083, 1.442695
        %v1166 = vpow.pop %v1165
        %v1167 = vmul.f32 %v1084, 1.442695
        %v1168 = vpow.pop %v1167
        %v1169 = vmul.f32 %v1085, 1.442695
        %v1170 = vpow.pop %v1169
        %v1171 = vmul.f32 %v1086, 1.442695
        %v1172 = vpow.pop %v1171
        %v1173 = vmul.f32 %v1087, 1.442695
        %v1174 = vpow.pop %v1173
        %v1175 = vmul.f32 %v1088, 1.442695
        %v1176 = vpow.pop %v1175
        %v1177 = vmul.f32 %v1089, 1.442695
        %v1178 = vpow.pop %v1177
        %v1179 = vmul.f32 %v1090, 1.442695
        %v1180 = vpow.pop %v1179
        %v1181 = vmul.f32 %v1091, 1.442695
        %v1182 = vpow.pop %v1181
        %v1183 = vmul.f32 %v1092, 1.442695
        %v1184 = vpow.pop %v1183
        %v1185 = vmul.f32 %v1093, 1.442695
        %v1186 = vpow.pop %v1185
        %v1187 = vmul.f32 %v1094, 1.442695
        %v1188 = vpow.pop %v1187
        %v1189 = vmul.f32 %v1095, 1.442695
        %v1190 = vpow.pop %v1189
        %v1191 = vmul.f32 %v1096, 1.442695
        %v1192 = vpow.pop %v1191
        %v1193 = vmul.f32 %v1097, 1.442695
        %v1194 = vpow.pop %v1193
        %v1195 = vmul.f32 %v1098, 1.442695
        %v1196 = vpow.pop %v1195
        %v1197 = vmul.f32 %v1099, 1.442695
        %v1198 = vpow.pop %v1197
        %v1199 = vmul.f32 %v1100, 1.442695
        %v1200 = vpow.pop %v1199
        %v1201 = vmul.f32 %v1101, 1.442695
        %v1202 = vpow.pop %v1201
        %v1203 = vmul.f32 %v1102, 1.442695
        %v1204 = vpow.pop %v1203
        %v1205 = vmul.f32 %v1103, 1.442695
        %v1206 = vpow.pop %v1205
        %v1207 = vmul.f32 %v1104, 1.442695
        %v1208 = vpow.pop %v1207
        %v1209 = vmul.f32 %v1105, 1.442695
        %v1210 = vpow.pop %v1209
        %v1211 = vmul.f32 %v1106, 1.442695
        %v1212 = vpow.pop %v1211
        %v1213 = vmul.f32 %v1107, 1.442695
        %v1214 = vpow.pop %v1213
        %v1215 = vmul.f32 %v1108, 1.442695
        %v1216 = vpow.pop %v1215
        %v1217 = vmul.f32 %v1109, 1.442695
        %v1218 = vpow.pop %v1217
        %v1219 = vmul.f32 %v1110, 1.442695
        %v1220 = vpow.pop %v1219
        %v1221 = vmul.f32 %v1111, 1.442695
        %v1222 = vpow.pop %v1221
        %v1223 = vmul.f32 %v1112, 1.442695
        %v1224 = vpow.pop %v1223
        %v1225 = vmul.f32 %v1113, 1.442695
        %v1226 = vpow.pop %v1225
        %v1227 = vmul.f32 %v1114, 1.442695
        %v1228 = vpow.pop %v1227
        %v1229 = vmul.f32 %v1115, 1.442695
        %v1230 = vpow.pop %v1229
        %v1231 = vmul.f32 %v1116, 1.442695
        %v1232 = vpow.pop %v1231
        %v1233 = vmul.f32 %v1117, 1.442695
        %v1234 = vpow.pop %v1233
        %v1235 = vmul.f32 %v1118, 1.442695
        %v1236 = vpow.pop %v1235
        %v1237 = vmul.f32 %v1119, 1.442695
        %v1238 = vpow.pop %v1237
        %v1239 = vmul.f32 %v1120, 1.442695
        %v1240 = vpow.pop %v1239
        %v1241 = vmul.f32 %v1121, 1.442695
        %v1242 = vpow.pop %v1241
        %v1243 = vmul.f32 %v1122, 1.442695
        %v1244 = vpow.pop %v1243
        %v1245 = vmul.f32 %v1123, 1.442695
        %v1246 = vpow.pop %v1245
        %v1247 = vmul.f32 %v1124, 1.442695
        %v1248 = vpow.pop %v1247
        %v1249 = vmul.f32 %v1125, 1.442695
        %v1250 = vpow.pop %v1249
        %v1251 = vmul.f32 %v1126, 1.442695
        %v1252 = vpow.pop %v1251
        %v1253 = vmul.f32 %v1127, 1.442695
        %v1254 = vpow.pop %v1253
        %v1255 = vmul.f32 %v1128, 1.442695
        %v1256 = vpow.pop %v1255
        %1257 = vmatprep.subr.mxu0 %v1132
        %1258 = vmatpush1.msra.mxu0 %v1130
        %1259 = vmatprep.subr.mxu0 %v1136
        %1260 = vmatpush1.msra.mxu0 %v1134
        %1261 = vmatprep.subr.mxu0 %v1140
        %1262 = vmatpush1.msra.mxu0 %v1138
        %1263 = vmatprep.subr.mxu0 %v1144
        %1264 = vmatpush1.msra.mxu0 %v1142
        %1265 = vmatprep.subr.mxu0 %v1148
        %1266 = vmatpush1.msra.mxu0 %v1146
        %1267 = vmatprep.subr.mxu0 %v1152
        %1268 = vmatpush1.msra.mxu0 %v1150
        %1269 = vmatprep.subr.mxu0 %v1156
        %1270 = vmatpush1.msra.mxu0 %v1154
        %1271 = vmatprep.subr.mxu0 %v1160
        %1272 = vmatpush1.msra.mxu0 %v1158
        %1273 = vmatprep.subr.mxu0 %v1164
        %1274 = vmatpush1.msra.mxu0 %v1162
        %1275 = vmatprep.subr.mxu0 %v1168
        %1276 = vmatpush1.msra.mxu0 %v1166
        %1277 = vmatprep.subr.mxu0 %v1172
        %1278 = vmatpush1.msra.mxu0 %v1170
        %1279 = vmatprep.subr.mxu0 %v1176
        %1280 = vmatpush1.msra.mxu0 %v1174
        %1281 = vmatprep.subr.mxu0 %v1180
        %1282 = vmatpush1.msra.mxu0 %v1178
        %1283 = vmatprep.subr.mxu0 %v1184
        %1284 = vmatpush1.msra.mxu0 %v1182
        %1285 = vmatprep.subr.mxu0 %v1188
        %1286 = vmatpush1.msra.mxu0 %v1186
        %1287 = vmatprep.subr.mxu0 %v1192
        %1288 = vmatpush1.msra.mxu0 %v1190
        %1289 = vmatprep.subr.mxu0 %v1196
        %1290 = vmatpush1.msra.mxu0 %v1194
        %1291 = vmatprep.subr.mxu0 %v1200
        %1292 = vmatpush1.msra.mxu0 %v1198
        %1293 = vmatprep.subr.mxu0 %v1204
        %1294 = vmatpush1.msra.mxu0 %v1202
        %1295 = vmatprep.subr.mxu0 %v1208
        %1296 = vmatpush1.msra.mxu0 %v1206
        %1297 = vmatprep.subr.mxu0 %v1212
        %1298 = vmatpush1.msra.mxu0 %v1210
        %1299 = vmatprep.subr.mxu0 %v1216
        %1300 = vmatpush1.msra.mxu0 %v1214
        %1301 = vmatprep.subr.mxu0 %v1220
        %1302 = vmatpush1.msra.mxu0 %v1218
        %1303 = vmatprep.subr.mxu0 %v1224
        %1304 = vmatpush1.msra.mxu0 %v1222
        %1305 = vmatprep.subr.mxu0 %v1228
        %1306 = vmatpush1.msra.mxu0 %v1226
        %1307 = vmatprep.subr.mxu0 %v1232
        %1308 = vmatpush1.msra.mxu0 %v1230
        %1309 = vmatprep.subr.mxu0 %v1236
        %1310 = vmatpush1.msra.mxu0 %v1234
        %1311 = vmatprep.subr.mxu0 %v1240
        %1312 = vmatpush1.msra.mxu0 %v1238
        %1313 = vmatprep.subr.mxu0 %v1244
        %1314 = vmatpush1.msra.mxu0 %v1242
        %1315 = vmatprep.subr.mxu0 %v1248
        %1316 = vmatpush1.msra.mxu0 %v1246
        %1317 = vmatprep.subr.mxu0 %v1252
        %1318 = vmatpush1.msra.mxu0 %v1250
        %1319 = vmatprep.subr.mxu0 %v1256
        %1320 = vmatpush1.msra.mxu0 %v1254
        %1321 = vmatprep.mubr.f32.mxu0 1.0
        %1322 = vmatmul.mubr.f32.gmra.mrb[0].mxu0 1.0
        %v1323 = vpop.f32.mrb[0].mxu0
        %v1324 = vadd.f32 0.0, %v1323
        %v1325 = vpop.f32.mrb[0].mxu0
        %v1326 = vadd.f32 0.0, %v1325
        %1327 = vdwg.mxu0
        %v1328 = vld [vmem:[#allocation4] sm:$0x3]
        %v1329 = vmul.f32 %v1053, %v1328
        %v1332 = vcombine.low %v1324, %v1326
        %v1334 = vunpack.c.l.s4 1966171168
        %v1335 = vunpack.c.0.s8 %v1334
        %v1336 = vlaneseq
        %v1337 = vshrl.u32 %v1336, 7
        %v1338 = vsub.s32 %v1335, %v1337
        %v1339 = vrot.slane %v1332, %v1338
        %v1341 = vunpack.c.l.s4 1966171168
        %v1342 = vunpack.c.0.s8 %v1341
        %v1343 = vlaneseq
        %v1344 = vshrl.u32 %v1343, 7
        %v1345 = vsub.s32 %v1342, %v1344
        %v1346 = vrot.slane %v1339, %v1345
        %v1348 = vadd.f32 %v1329, %v1346
        %v1349 = vlaneseq
        %vm1350 = vcmp.ge.s32.totalorder %v1349, 0
        %vm1351 = vcmp.lt.s32.totalorder %v1349, 256
        %vm1352 = vmand %vm1350, %vm1351
        %1353 = vst.msk [vmem:[#allocation4] sm:$0x3] %vm1352, %v1348
        %v1354 = vld [vmem:[#allocation5] sm:$0xff]
        %v1355 = vld [vmem:[#allocation5 + $0x8] sm:$0xff]
        %v1357 = vlaneseq
        %v1358 = vshrl.u32 %v1357, 7
        %v1359 = vsub.s32 0, %v1358
        %v1360 = vrot.slane %v1053, %v1359
        %v1361 = vlaneseq
        %v1362 = vshrl.u32 %v1361, 7
        %v1363 = vsub.s32 1, %v1362
        %v1364 = vrot.slane %v1053, %v1363
        %v1367 = vmul.f32 %v1360, %v1354
        %v1368 = vmul.f32 %v1364, %v1355
        %1369 = vmatprep.subr.mxu0 %v1132
        %1370 = vmatpush1.msra.mxu0 %v1130
        %1371 = vmatprep.subr.mxu0 %v1136
        %1372 = vmatpush1.msra.mxu0 %v1134
        %1373 = vmatprep.subr.mxu0 %v1140
        %1374 = vmatpush1.msra.mxu0 %v1138
        %1375 = vmatprep.subr.mxu0 %v1144
        %1376 = vmatpush1.msra.mxu0 %v1142
        %1377 = vmatprep.subr.mxu0 %v1148
        %1378 = vmatpush1.msra.mxu0 %v1146
        %1379 = vmatprep.subr.mxu0 %v1152
        %1380 = vmatpush1.msra.mxu0 %v1150
        %1381 = vmatprep.subr.mxu0 %v1156
        %1382 = vmatpush1.msra.mxu0 %v1154
        %1383 = vmatprep.subr.mxu0 %v1160
        %1384 = vmatpush1.msra.mxu0 %v1158
        %1385 = vmatprep.subr.mxu0 %v1164
        %1386 = vmatpush1.msra.mxu0 %v1162
        %1387 = vmatprep.subr.mxu0 %v1168
        %1388 = vmatpush1.msra.mxu0 %v1166
        %1389 = vmatprep.subr.mxu0 %v1172
        %1390 = vmatpush1.msra.mxu0 %v1170
        %1391 = vmatprep.subr.mxu0 %v1176
        %1392 = vmatpush1.msra.mxu0 %v1174
        %1393 = vmatprep.subr.mxu0 %v1180
        %1394 = vmatpush1.msra.mxu0 %v1178
        %1395 = vmatprep.subr.mxu0 %v1184
        %1396 = vmatpush1.msra.mxu0 %v1182
        %1397 = vmatprep.subr.mxu0 %v1188
        %1398 = vmatpush1.msra.mxu0 %v1186
        %1399 = vmatprep.subr.mxu0 %v1192
        %1400 = vmatpush1.msra.mxu0 %v1190
        %1401 = vmatprep.subr.mxu0 %v1196
        %1402 = vmatpush1.msra.mxu0 %v1194
        %1403 = vmatprep.subr.mxu0 %v1200
        %1404 = vmatpush1.msra.mxu0 %v1198
        %1405 = vmatprep.subr.mxu0 %v1204
        %1406 = vmatpush1.msra.mxu0 %v1202
        %1407 = vmatprep.subr.mxu0 %v1208
        %1408 = vmatpush1.msra.mxu0 %v1206
        %1409 = vmatprep.subr.mxu0 %v1212
        %1410 = vmatpush1.msra.mxu0 %v1210
        %1411 = vmatprep.subr.mxu0 %v1216
        %1412 = vmatpush1.msra.mxu0 %v1214
        %1413 = vmatprep.subr.mxu0 %v1220
        %1414 = vmatpush1.msra.mxu0 %v1218
        %1415 = vmatprep.subr.mxu0 %v1224
        %1416 = vmatpush1.msra.mxu0 %v1222
        %1417 = vmatprep.subr.mxu0 %v1228
        %1418 = vmatpush1.msra.mxu0 %v1226
        %1419 = vmatprep.subr.mxu0 %v1232
        %1420 = vmatpush1.msra.mxu0 %v1230
        %1421 = vmatprep.subr.mxu0 %v1236
        %1422 = vmatpush1.msra.mxu0 %v1234
        %1423 = vmatprep.subr.mxu0 %v1240
        %1424 = vmatpush1.msra.mxu0 %v1238
        %1425 = vmatprep.subr.mxu0 %v1244
        %1426 = vmatpush1.msra.mxu0 %v1242
        %1427 = vmatprep.subr.mxu0 %v1248
        %1428 = vmatpush1.msra.mxu0 %v1246
        %1429 = vmatprep.subr.mxu0 %v1252
        %1430 = vmatpush1.msra.mxu0 %v1250
        %1431 = vmatprep.subr.mxu0 %v1256
        %1432 = vmatpush1.msra.mxu0 %v1254
        %1433 = vmatprep.mubr.f32.mxu0 %v527
        %1434 = vmatmul.mubr.f32.gmra.mrb[0].mxu0 %v525
        %v1435 = vpop.f32.mrb[0].mxu0
        %v1436 = vadd.f32 0.0, %v1435
        %v1437 = vpop.f32.mrb[0].mxu0
        %v1438 = vadd.f32 0.0, %v1437
        %1439 = vdwg.mxu0
        %v1440 = vadd.f32 %v1367, %v1436
        %v1441 = vadd.f32 %v1368, %v1438
        %1442 = vst [vmem:[#allocation5] sm:$0xff] %v1440
        %1443 = vst [vmem:[#allocation5 + $0x8] sm:$0xff] %v1441
        %1444 = vst.msk [vmem:[#allocation3] sm:$0x3] %vm1352, %v1050
        %1445 = vxpose.xlu0.b32.start [1/16] %v519, 128
        %1446 = vxpose.xlu0.b32.cont [2/16] 0.0, 128
        %1447 = vxpose.xlu0.b32.cont [3/16] 0.0, 128
        %1448 = vxpose.xlu0.b32.cont [4/16] 0.0, 128
        %1449 = vxpose.xlu0.b32.cont [5/16] 0.0, 128
        %1450 = vxpose.xlu0.b32.cont [6/16] 0.0, 128
        %1451 = vxpose.xlu0.b32.cont [7/16] 0.0, 128
        %1452 = vxpose.xlu0.b32.cont [8/16] 0.0, 128
        %1453 = vxpose.xlu0.b32.cont [9/16] 0.0, 128
        %1454 = vxpose.xlu0.b32.cont [10/16] 0.0, 128
        %1455 = vxpose.xlu0.b32.cont [11/16] 0.0, 128
        %1456 = vxpose.xlu0.b32.cont [12/16] 0.0, 128
        %1457 = vxpose.xlu0.b32.cont [13/16] 0.0, 128
        %1458 = vxpose.xlu0.b32.cont [14/16] 0.0, 128
        %1459 = vxpose.xlu0.b32.cont [15/16] 0.0, 128
        %1460 = vxpose.xlu0.b32.end [16/16] 0.0, 128
        %v1461 = vpop.trf.xlu0
        %v1462 = vpop.trf.xlu0
        %v1463 = vpop.trf.xlu0
        %v1464 = vpop.trf.xlu0
        %v1465 = vpop.trf.xlu0
        %v1466 = vpop.trf.xlu0
        %v1467 = vpop.trf.xlu0
        %v1468 = vpop.trf.xlu0
        %v1469 = vpop.trf.xlu0
        %v1470 = vpop.trf.xlu0
        %v1471 = vpop.trf.xlu0
        %v1472 = vpop.trf.xlu0
        %v1473 = vpop.trf.xlu0
        %v1474 = vpop.trf.xlu0
        %v1475 = vpop.trf.xlu0
        %v1476 = vpop.trf.xlu0
        %1477 = vxpose.xlu0.b32.start [1/16] %v521, 128
        %1478 = vxpose.xlu0.b32.cont [2/16] 0.0, 128
        %1479 = vxpose.xlu0.b32.cont [3/16] 0.0, 128
        %1480 = vxpose.xlu0.b32.cont [4/16] 0.0, 128
        %1481 = vxpose.xlu0.b32.cont [5/16] 0.0, 128
        %1482 = vxpose.xlu0.b32.cont [6/16] 0.0, 128
        %1483 = vxpose.xlu0.b32.cont [7/16] 0.0, 128
        %1484 = vxpose.xlu0.b32.cont [8/16] 0.0, 128
        %1485 = vxpose.xlu0.b32.cont [9/16] 0.0, 128
        %1486 = vxpose.xlu0.b32.cont [10/16] 0.0, 128
        %1487 = vxpose.xlu0.b32.cont [11/16] 0.0, 128
        %1488 = vxpose.xlu0.b32.cont [12/16] 0.0, 128
        %1489 = vxpose.xlu0.b32.cont [13/16] 0.0, 128
        %1490 = vxpose.xlu0.b32.cont [14/16] 0.0, 128
        %1491 = vxpose.xlu0.b32.cont [15/16] 0.0, 128
        %1492 = vxpose.xlu0.b32.end [16/16] 0.0, 128
        %v1493 = vpop.trf.xlu0
        %v1494 = vpop.trf.xlu0
        %v1495 = vpop.trf.xlu0
        %v1496 = vpop.trf.xlu0
        %v1497 = vpop.trf.xlu0
        %v1498 = vpop.trf.xlu0
        %v1499 = vpop.trf.xlu0
        %v1500 = vpop.trf.xlu0
        %v1501 = vpop.trf.xlu0
        %v1502 = vpop.trf.xlu0
        %v1503 = vpop.trf.xlu0
        %v1504 = vpop.trf.xlu0
        %v1505 = vpop.trf.xlu0
        %v1506 = vpop.trf.xlu0
        %v1507 = vpop.trf.xlu0
        %v1508 = vpop.trf.xlu0
        %v1510 = vsel %vm603, %v1461, 0
        %v1513 = vsel %vm603, %v1462, 0
        %v1516 = vsel %vm603, %v1463, 0
        %v1519 = vsel %vm603, %v1464, 0
        %v1522 = vsel %vm603, %v1465, 0
        %v1525 = vsel %vm603, %v1466, 0
        %v1528 = vsel %vm603, %v1467, 0
        %v1531 = vsel %vm603, %v1468, 0
        %v1534 = vsel %vm603, %v1469, 0
        %v1537 = vsel %vm603, %v1470, 0
        %v1540 = vsel %vm603, %v1471, 0
        %v1543 = vsel %vm603, %v1472, 0
        %v1546 = vsel %vm603, %v1473, 0
        %v1549 = vsel %vm603, %v1474, 0
        %v1552 = vsel %vm603, %v1475, 0
        %v1555 = vsel %vm603, %v1476, 0
        %v1558 = vsel %vm603, %v1493, 0
        %v1561 = vsel %vm603, %v1494, 0
        %v1564 = vsel %vm603, %v1495, 0
        %v1567 = vsel %vm603, %v1496, 0
        %v1570 = vsel %vm603, %v1497, 0
        %v1573 = vsel %vm603, %v1498, 0
        %v1576 = vsel %vm603, %v1499, 0
        %v1579 = vsel %vm603, %v1500, 0
        %v1582 = vsel %vm603, %v1501, 0
        %v1585 = vsel %vm603, %v1502, 0
        %v1588 = vsel %vm603, %v1503, 0
        %v1591 = vsel %vm603, %v1504, 0
        %v1594 = vsel %vm603, %v1505, 0
        %v1597 = vsel %vm603, %v1506, 0
        %v1600 = vsel %vm603, %v1507, 0
        %v1603 = vsel %vm603, %v1508, 0
        %1605 = vmatprep.subr.mxu0 %v538
        %1606 = vmatpush1.msra.mxu0 %v537
        %1607 = vmatprep.subr.mxu0 0.0
        %1608 = vmatpush1.msra.mxu0 0.0
        %1609 = vmatprep.subr.mxu0 0.0
        %1610 = vmatpush1.msra.mxu0 0.0
        %1611 = vmatprep.subr.mxu0 0.0
        %1612 = vmatpush1.msra.mxu0 0.0
        %1613 = vmatprep.subr.mxu0 0.0
        %1614 = vmatpush1.msra.mxu0 0.0
        %1615 = vmatprep.subr.mxu0 0.0
        %1616 = vmatpush1.msra.mxu0 0.0
        %1617 = vmatprep.subr.mxu0 0.0
        %1618 = vmatpush1.msra.mxu0 0.0
        %1619 = vmatprep.subr.mxu0 0.0
        %1620 = vmatpush1.msra.mxu0 0.0
        %1621 = vmatprep.subr.mxu0 0.0
        %1622 = vmatpush1.msra.mxu0 0.0
        %1623 = vmatprep.subr.mxu0 0.0
        %1624 = vmatpush1.msra.mxu0 0.0
        %1625 = vmatprep.subr.mxu0 0.0
        %1626 = vmatpush1.msra.mxu0 0.0
        %1627 = vmatprep.subr.mxu0 0.0
        %1628 = vmatpush1.msra.mxu0 0.0
        %1629 = vmatprep.subr.mxu0 0.0
        %1630 = vmatpush1.msra.mxu0 0.0
        %1631 = vmatprep.subr.mxu0 0.0
        %1632 = vmatpush1.msra.mxu0 0.0
        %1633 = vmatprep.subr.mxu0 0.0
        %1634 = vmatpush1.msra.mxu0 0.0
        %1635 = vmatprep.subr.mxu0 0.0
        %1636 = vmatpush1.msra.mxu0 0.0
        %1637 = vmatprep.subr.mxu0 0.0
        %1638 = vmatpush1.msra.mxu0 0.0
        %1639 = vmatprep.subr.mxu0 0.0
        %1640 = vmatpush1.msra.mxu0 0.0
        %1641 = vmatprep.subr.mxu0 0.0
        %1642 = vmatpush1.msra.mxu0 0.0
        %1643 = vmatprep.subr.mxu0 0.0
        %1644 = vmatpush1.msra.mxu0 0.0
        %1645 = vmatprep.subr.mxu0 0.0
        %1646 = vmatpush1.msra.mxu0 0.0
        %1647 = vmatprep.subr.mxu0 0.0
        %1648 = vmatpush1.msra.mxu0 0.0
        %1649 = vmatprep.subr.mxu0 0.0
        %1650 = vmatpush1.msra.mxu0 0.0
        %1651 = vmatprep.subr.mxu0 0.0
        %1652 = vmatpush1.msra.mxu0 0.0
        %1653 = vmatprep.subr.mxu0 0.0
        %1654 = vmatpush1.msra.mxu0 0.0
        %1655 = vmatprep.subr.mxu0 0.0
        %1656 = vmatpush1.msra.mxu0 0.0
        %1657 = vmatprep.subr.mxu0 0.0
        %1658 = vmatpush1.msra.mxu0 0.0
        %1659 = vmatprep.subr.mxu0 0.0
        %1660 = vmatpush1.msra.mxu0 0.0
        %1661 = vmatprep.subr.mxu0 0.0
        %1662 = vmatpush1.msra.mxu0 0.0
        %1663 = vmatprep.subr.mxu0 0.0
        %1664 = vmatpush1.msra.mxu0 0.0
        %1665 = vmatprep.subr.mxu0 0.0
        %1666 = vmatpush1.msra.mxu0 0.0
        %1667 = vmatprep.subr.mxu0 0.0
        %1668 = vmatpush1.msra.mxu0 0.0
        %1669 = vmatprep.mubr.f32.mxu0 0.0
        %1670 = vmatmul.mubr.f32.gmra.mrb[0].mxu0 %v1510
        %v1671 = vpop.f32.mrb[0].mxu0
        %v1672 = vadd.f32 0.0, %v1671
        %v1673 = vpop.f32.mrb[0].mxu0
        %v1674 = vadd.f32 0.0, %v1673
        %1675 = vmatprep.mubr.f32.mxu0 0.0
        %1676 = vmatmul.mubr.f32.gmra.mrb[0].mxu0 %v1513
        %v1677 = vpop.f32.mrb[0].mxu0
        %v1678 = vadd.f32 0.0, %v1677
        %v1679 = vpop.f32.mrb[0].mxu0
        %v1680 = vadd.f32 0.0, %v1679
        %1681 = vmatprep.mubr.f32.mxu0 0.0
        %1682 = vmatmul.mubr.f32.gmra.mrb[0].mxu0 %v1516
        %v1683 = vpop.f32.mrb[0].mxu0
        %v1684 = vadd.f32 0.0, %v1683
        %v1685 = vpop.f32.mrb[0].mxu0
        %v1686 = vadd.f32 0.0, %v1685
        %1687 = vmatprep.mubr.f32.mxu0 0.0
        %1688 = vmatmul.mubr.f32.gmra.mrb[0].mxu0 %v1519
        %v1689 = vpop.f32.mrb[0].mxu0
        %v1690 = vadd.f32 0.0, %v1689
        %v1691 = vpop.f32.mrb[0].mxu0
        %v1692 = vadd.f32 0.0, %v1691
        %1693 = vmatprep.mubr.f32.mxu0 0.0
        %1694 = vmatmul.mubr.f32.gmra.mrb[0].mxu0 %v1522
        %v1695 = vpop.f32.mrb[0].mxu0
        %v1696 = vadd.f32 0.0, %v1695
        %v1697 = vpop.f32.mrb[0].mxu0
        %v1698 = vadd.f32 0.0, %v1697
        %1699 = vmatprep.mubr.f32.mxu0 0.0
        %1700 = vmatmul.mubr.f32.gmra.mrb[0].mxu0 %v1525
        %v1701 = vpop.f32.mrb[0].mxu0
        %v1702 = vadd.f32 0.0, %v1701
        %v1703 = vpop.f32.mrb[0].mxu0
        %v1704 = vadd.f32 0.0, %v1703
        %1705 = vmatprep.mubr.f32.mxu0 0.0
        %1706 = vmatmul.mubr.f32.gmra.mrb[0].mxu0 %v1528
        %v1707 = vpop.f32.mrb[0].mxu0
        %v1708 = vadd.f32 0.0, %v1707
        %v1709 = vpop.f32.mrb[0].mxu0
        %v1710 = vadd.f32 0.0, %v1709
        %1711 = vmatprep.mubr.f32.mxu0 0.0
        %1712 = vmatmul.mubr.f32.gmra.mrb[0].mxu0 %v1531
        %v1713 = vpop.f32.mrb[0].mxu0
        %v1714 = vadd.f32 0.0, %v1713
        %v1715 = vpop.f32.mrb[0].mxu0
        %v1716 = vadd.f32 0.0, %v1715
        %1717 = vmatprep.mubr.f32.mxu0 0.0
        %1718 = vmatmul.mubr.f32.gmra.mrb[0].mxu0 %v1534
        %v1719 = vpop.f32.mrb[0].mxu0
        %v1720 = vadd.f32 0.0, %v1719
        %v1721 = vpop.f32.mrb[0].mxu0
        %v1722 = vadd.f32 0.0, %v1721
        %1723 = vmatprep.mubr.f32.mxu0 0.0
        %1724 = vmatmul.mubr.f32.gmra.mrb[0].mxu0 %v1537
        %v1725 = vpop.f32.mrb[0].mxu0
        %v1726 = vadd.f32 0.0, %v1725
        %v1727 = vpop.f32.mrb[0].mxu0
        %v1728 = vadd.f32 0.0, %v1727
        %1729 = vmatprep.mubr.f32.mxu0 0.0
        %1730 = vmatmul.mubr.f32.gmra.mrb[0].mxu0 %v1540
        %v1731 = vpop.f32.mrb[0].mxu0
        %v1732 = vadd.f32 0.0, %v1731
        %v1733 = vpop.f32.mrb[0].mxu0
        %v1734 = vadd.f32 0.0, %v1733
        %1735 = vmatprep.mubr.f32.mxu0 0.0
        %1736 = vmatmul.mubr.f32.gmra.mrb[0].mxu0 %v1543
        %v1737 = vpop.f32.mrb[0].mxu0
        %v1738 = vadd.f32 0.0, %v1737
        %v1739 = vpop.f32.mrb[0].mxu0
        %v1740 = vadd.f32 0.0, %v1739
        %1741 = vmatprep.mubr.f32.mxu0 0.0
        %1742 = vmatmul.mubr.f32.gmra.mrb[0].mxu0 %v1546
        %v1743 = vpop.f32.mrb[0].mxu0
        %v1744 = vadd.f32 0.0, %v1743
        %v1745 = vpop.f32.mrb[0].mxu0
        %v1746 = vadd.f32 0.0, %v1745
        %1747 = vmatprep.mubr.f32.mxu0 0.0
        %1748 = vmatmul.mubr.f32.gmra.mrb[0].mxu0 %v1549
        %v1749 = vpop.f32.mrb[0].mxu0
        %v1750 = vadd.f32 0.0, %v1749
        %v1751 = vpop.f32.mrb[0].mxu0
        %v1752 = vadd.f32 0.0, %v1751
        %1753 = vmatprep.mubr.f32.mxu0 0.0
        %1754 = vmatmul.mubr.f32.gmra.mrb[0].mxu0 %v1552
        %v1755 = vpop.f32.mrb[0].mxu0
        %v1756 = vadd.f32 0.0, %v1755
        %v1757 = vpop.f32.mrb[0].mxu0
        %v1758 = vadd.f32 0.0, %v1757
        %1759 = vmatprep.mubr.f32.mxu0 0.0
        %1760 = vmatmul.mubr.f32.gmra.mrb[0].mxu0 %v1555
        %v1761 = vpop.f32.mrb[0].mxu0
        %v1762 = vadd.f32 0.0, %v1761
        %v1763 = vpop.f32.mrb[0].mxu0
        %v1764 = vadd.f32 0.0, %v1763
        %1765 = vmatprep.mubr.f32.mxu0 0.0
        %1766 = vmatmul.mubr.f32.gmra.mrb[0].mxu0 %v1558
        %v1767 = vpop.f32.mrb[0].mxu0
        %v1768 = vadd.f32 0.0, %v1767
        %v1769 = vpop.f32.mrb[0].mxu0
        %v1770 = vadd.f32 0.0, %v1769
        %1771 = vmatprep.mubr.f32.mxu0 0.0
        %1772 = vmatmul.mubr.f32.gmra.mrb[0].mxu0 %v1561
        %v1773 = vpop.f32.mrb[0].mxu0
        %v1774 = vadd.f32 0.0, %v1773
        %v1775 = vpop.f32.mrb[0].mxu0
        %v1776 = vadd.f32 0.0, %v1775
        %1777 = vmatprep.mubr.f32.mxu0 0.0
        %1778 = vmatmul.mubr.f32.gmra.mrb[0].mxu0 %v1564
        %v1779 = vpop.f32.mrb[0].mxu0
        %v1780 = vadd.f32 0.0, %v1779
        %v1781 = vpop.f32.mrb[0].mxu0
        %v1782 = vadd.f32 0.0, %v1781
        %1783 = vmatprep.mubr.f32.mxu0 0.0
        %1784 = vmatmul.mubr.f32.gmra.mrb[0].mxu0 %v1567
        %v1785 = vpop.f32.mrb[0].mxu0
        %v1786 = vadd.f32 0.0, %v1785
        %v1787 = vpop.f32.mrb[0].mxu0
        %v1788 = vadd.f32 0.0, %v1787
        %1789 = vmatprep.mubr.f32.mxu0 0.0
        %1790 = vmatmul.mubr.f32.gmra.mrb[0].mxu0 %v1570
        %v1791 = vpop.f32.mrb[0].mxu0
        %v1792 = vadd.f32 0.0, %v1791
        %v1793 = vpop.f32.mrb[0].mxu0
        %v1794 = vadd.f32 0.0, %v1793
        %1795 = vmatprep.mubr.f32.mxu0 0.0
        %1796 = vmatmul.mubr.f32.gmra.mrb[0].mxu0 %v1573
        %v1797 = vpop.f32.mrb[0].mxu0
        %v1798 = vadd.f32 0.0, %v1797
        %v1799 = vpop.f32.mrb[0].mxu0
        %v1800 = vadd.f32 0.0, %v1799
        %1801 = vmatprep.mubr.f32.mxu0 0.0
        %1802 = vmatmul.mubr.f32.gmra.mrb[0].mxu0 %v1576
        %v1803 = vpop.f32.mrb[0].mxu0
        %v1804 = vadd.f32 0.0, %v1803
        %v1805 = vpop.f32.mrb[0].mxu0
        %v1806 = vadd.f32 0.0, %v1805
        %1807 = vmatprep.mubr.f32.mxu0 0.0
        %1808 = vmatmul.mubr.f32.gmra.mrb[0].mxu0 %v1579
        %v1809 = vpop.f32.mrb[0].mxu0
        %v1810 = vadd.f32 0.0, %v1809
        %v1811 = vpop.f32.mrb[0].mxu0
        %v1812 = vadd.f32 0.0, %v1811
        %1813 = vmatprep.mubr.f32.mxu0 0.0
        %1814 = vmatmul.mubr.f32.gmra.mrb[0].mxu0 %v1582
        %v1815 = vpop.f32.mrb[0].mxu0
        %v1816 = vadd.f32 0.0, %v1815
        %v1817 = vpop.f32.mrb[0].mxu0
        %v1818 = vadd.f32 0.0, %v1817
        %1819 = vmatprep.mubr.f32.mxu0 0.0
        %1820 = vmatmul.mubr.f32.gmra.mrb[0].mxu0 %v1585
        %v1821 = vpop.f32.mrb[0].mxu0
        %v1822 = vadd.f32 0.0, %v1821
        %v1823 = vpop.f32.mrb[0].mxu0
        %v1824 = vadd.f32 0.0, %v1823
        %1825 = vmatprep.mubr.f32.mxu0 0.0
        %1826 = vmatmul.mubr.f32.gmra.mrb[0].mxu0 %v1588
        %v1827 = vpop.f32.mrb[0].mxu0
        %v1828 = vadd.f32 0.0, %v1827
        %v1829 = vpop.f32.mrb[0].mxu0
        %v1830 = vadd.f32 0.0, %v1829
        %1831 = vmatprep.mubr.f32.mxu0 0.0
        %1832 = vmatmul.mubr.f32.gmra.mrb[0].mxu0 %v1591
        %v1833 = vpop.f32.mrb[0].mxu0
        %v1834 = vadd.f32 0.0, %v1833
        %v1835 = vpop.f32.mrb[0].mxu0
        %v1836 = vadd.f32 0.0, %v1835
        %1837 = vmatprep.mubr.f32.mxu0 0.0
        %1838 = vmatmul.mubr.f32.gmra.mrb[0].mxu0 %v1594
        %v1839 = vpop.f32.mrb[0].mxu0
        %v1840 = vadd.f32 0.0, %v1839
        %v1841 = vpop.f32.mrb[0].mxu0
        %v1842 = vadd.f32 0.0, %v1841
        %1843 = vmatprep.mubr.f32.mxu0 0.0
        %1844 = vmatmul.mubr.f32.gmra.mrb[0].mxu0 %v1597
        %v1845 = vpop.f32.mrb[0].mxu0
        %v1846 = vadd.f32 0.0, %v1845
        %v1847 = vpop.f32.mrb[0].mxu0
        %v1848 = vadd.f32 0.0, %v1847
        %1849 = vmatprep.mubr.f32.mxu0 0.0
        %1850 = vmatmul.mubr.f32.gmra.mrb[0].mxu0 %v1600
        %v1851 = vpop.f32.mrb[0].mxu0
        %v1852 = vadd.f32 0.0, %v1851
        %v1853 = vpop.f32.mrb[0].mxu0
        %v1854 = vadd.f32 0.0, %v1853
        %1855 = vmatprep.mubr.f32.mxu0 0.0
        %1856 = vmatmul.mubr.f32.gmra.mrb[0].mxu0 %v1603
        %v1857 = vpop.f32.mrb[0].mxu0
        %v1858 = vadd.f32 0.0, %v1857
        %v1859 = vpop.f32.mrb[0].mxu0
        %v1860 = vadd.f32 0.0, %v1859
        %1861 = vdwg.mxu0
        %s1862 = scalar_lea.vmem [#allocation3], 2
        %v1863 = vld [vmem:[%s1862] sm:$0x3]
        %v1864 = vmax.f32 %v1672, %v1684
        %v1865 = vmax.f32 %v1678, %v1690
        %v1866 = vmax.f32 %v1864, %v1696
        %v1867 = vmax.f32 %v1865, %v1702
        %v1868 = vmax.f32 %v1866, %v1708
        %v1869 = vmax.f32 %v1867, %v1714
        %v1870 = vmax.f32 %v1868, %v1720
        %v1871 = vmax.f32 %v1869, %v1726
        %v1872 = vmax.f32 %v1870, %v1732
        %v1873 = vmax.f32 %v1871, %v1738
        %v1874 = vmax.f32 %v1872, %v1744
        %v1875 = vmax.f32 %v1873, %v1750
        %v1876 = vmax.f32 %v1874, %v1756
        %v1877 = vmax.f32 %v1875, %v1762
        %v1878 = vmax.f32 %v1876, %v1768
        %v1879 = vmax.f32 %v1877, %v1774
        %v1880 = vmax.f32 %v1878, %v1780
        %v1881 = vmax.f32 %v1879, %v1786
        %v1882 = vmax.f32 %v1880, %v1792
        %v1883 = vmax.f32 %v1881, %v1798
        %v1884 = vmax.f32 %v1882, %v1804
        %v1885 = vmax.f32 %v1883, %v1810
        %v1886 = vmax.f32 %v1884, %v1816
        %v1887 = vmax.f32 %v1885, %v1822
        %v1888 = vmax.f32 %v1886, %v1828
        %v1889 = vmax.f32 %v1887, %v1834
        %v1890 = vmax.f32 %v1888, %v1840
        %v1891 = vmax.f32 %v1889, %v1846
        %v1892 = vmax.f32 %v1890, %v1852
        %v1893 = vmax.f32 %v1891, %v1858
        %v1894 = vmax.f32 %v1892, %v1893
        %v1895 = vrot.slane %v1894, 4
        %v1896 = vmax.f32 %v1894, %v1895
        %v1897 = vrot.slane %v1896, 2
        %v1898 = vmax.f32 %v1896, %v1897
        %v1899 = vrot.slane %v1898, 1
        %v1900 = vmax.f32 %v1898, %v1899
        %v1901 = vmax.f32 %v1674, %v1686
        %v1902 = vmax.f32 %v1680, %v1692
        %v1903 = vmax.f32 %v1901, %v1698
        %v1904 = vmax.f32 %v1902, %v1704
        %v1905 = vmax.f32 %v1903, %v1710
        %v1906 = vmax.f32 %v1904, %v1716
        %v1907 = vmax.f32 %v1905, %v1722
        %v1908 = vmax.f32 %v1906, %v1728
        %v1909 = vmax.f32 %v1907, %v1734
        %v1910 = vmax.f32 %v1908, %v1740
        %v1911 = vmax.f32 %v1909, %v1746
        %v1912 = vmax.f32 %v1910, %v1752
        %v1913 = vmax.f32 %v1911, %v1758
        %v1914 = vmax.f32 %v1912, %v1764
        %v1915 = vmax.f32 %v1913, %v1770
        %v1916 = vmax.f32 %v1914, %v1776
        %v1917 = vmax.f32 %v1915, %v1782
        %v1918 = vmax.f32 %v1916, %v1788
        %v1919 = vmax.f32 %v1917, %v1794
        %v1920 = vmax.f32 %v1918, %v1800
        %v1921 = vmax.f32 %v1919, %v1806
        %v1922 = vmax.f32 %v1920, %v1812
        %v1923 = vmax.f32 %v1921, %v1818
        %v1924 = vmax.f32 %v1922, %v1824
        %v1925 = vmax.f32 %v1923, %v1830
        %v1926 = vmax.f32 %v1924, %v1836
        %v1927 = vmax.f32 %v1925, %v1842
        %v1928 = vmax.f32 %v1926, %v1848
        %v1929 = vmax.f32 %v1927, %v1854
        %v1930 = vmax.f32 %v1928, %v1860
        %v1931 = vmax.f32 %v1929, %v1930
        %v1932 = vrot.slane %v1931, 4
        %v1933 = vmax.f32 %v1931, %v1932
        %v1934 = vrot.slane %v1933, 2
        %v1935 = vmax.f32 %v1933, %v1934
        %v1936 = vrot.slane %v1935, 1
        %v1937 = vmax.f32 %v1935, %v1936
        %v1940 = vcombine.low %v1900, %v1937
        %v1942 = vunpack.c.l.s4 1966171168
        %v1943 = vunpack.c.0.s8 %v1942
        %v1944 = vlaneseq
        %v1945 = vshrl.u32 %v1944, 7
        %v1946 = vsub.s32 %v1943, %v1945
        %v1947 = vrot.slane %v1940, %v1946
        %v1949 = vunpack.c.l.s4 1966171168
        %v1950 = vunpack.c.0.s8 %v1949
        %v1951 = vlaneseq
        %v1952 = vshrl.u32 %v1951, 7
        %v1953 = vsub.s32 %v1950, %v1952
        %v1954 = vrot.slane %v1947, %v1953
        %v1956 = vmax.f32 %v1863, %v1954
        %v1957 = vsub.f32 %v1863, %v1956
        %v1958 = vmul.f32 %v1957, 1.442695
        %v1959 = vpow.pop %v1958
        %v1961 = vlaneseq
        %v1962 = vshrl.u32 %v1961, 7
        %v1963 = vsub.s32 0, %v1962
        %v1964 = vrot.slane %v1956, %v1963
        %v1965 = vlaneseq
        %v1966 = vshrl.u32 %v1965, 7
        %v1967 = vsub.s32 1, %v1966
        %v1968 = vrot.slane %v1956, %v1967
        %v1971 = vsub.f32 %v1672, %v1964
        %v1972 = vsub.f32 %v1674, %v1968
        %v1973 = vsub.f32 %v1678, %v1964
        %v1974 = vsub.f32 %v1680, %v1968
        %v1975 = vsub.f32 %v1684, %v1964
        %v1976 = vsub.f32 %v1686, %v1968
        %v1977 = vsub.f32 %v1690, %v1964
        %v1978 = vsub.f32 %v1692, %v1968
        %v1979 = vsub.f32 %v1696, %v1964
        %v1980 = vsub.f32 %v1698, %v1968
        %v1981 = vsub.f32 %v1702, %v1964
        %v1982 = vsub.f32 %v1704, %v1968
        %v1983 = vsub.f32 %v1708, %v1964
        %v1984 = vsub.f32 %v1710, %v1968
        %v1985 = vsub.f32 %v1714, %v1964
        %v1986 = vsub.f32 %v1716, %v1968
        %v1987 = vsub.f32 %v1720, %v1964
        %v1988 = vsub.f32 %v1722, %v1968
        %v1989 = vsub.f32 %v1726, %v1964
        %v1990 = vsub.f32 %v1728, %v1968
        %v1991 = vsub.f32 %v1732, %v1964
        %v1992 = vsub.f32 %v1734, %v1968
        %v1993 = vsub.f32 %v1738, %v1964
        %v1994 = vsub.f32 %v1740, %v1968
        %v1995 = vsub.f32 %v1744, %v1964
        %v1996 = vsub.f32 %v1746, %v1968
        %v1997 = vsub.f32 %v1750, %v1964
        %v1998 = vsub.f32 %v1752, %v1968
        %v1999 = vsub.f32 %v1756, %v1964
        %v2000 = vsub.f32 %v1758, %v1968
        %v2001 = vsub.f32 %v1762, %v1964
        %v2002 = vsub.f32 %v1764, %v1968
        %v2003 = vsub.f32 %v1768, %v1964
        %v2004 = vsub.f32 %v1770, %v1968
        %v2005 = vsub.f32 %v1774, %v1964
        %v2006 = vsub.f32 %v1776, %v1968
        %v2007 = vsub.f32 %v1780, %v1964
        %v2008 = vsub.f32 %v1782, %v1968
        %v2009 = vsub.f32 %v1786, %v1964
        %v2010 = vsub.f32 %v1788, %v1968
        %v2011 = vsub.f32 %v1792, %v1964
        %v2012 = vsub.f32 %v1794, %v1968
        %v2013 = vsub.f32 %v1798, %v1964
        %v2014 = vsub.f32 %v1800, %v1968
        %v2015 = vsub.f32 %v1804, %v1964
        %v2016 = vsub.f32 %v1806, %v1968
        %v2017 = vsub.f32 %v1810, %v1964
        %v2018 = vsub.f32 %v1812, %v1968
        %v2019 = vsub.f32 %v1816, %v1964
        %v2020 = vsub.f32 %v1818, %v1968
        %v2021 = vsub.f32 %v1822, %v1964
        %v2022 = vsub.f32 %v1824, %v1968
        %v2023 = vsub.f32 %v1828, %v1964
        %v2024 = vsub.f32 %v1830, %v1968
        %v2025 = vsub.f32 %v1834, %v1964
        %v2026 = vsub.f32 %v1836, %v1968
        %v2027 = vsub.f32 %v1840, %v1964
        %v2028 = vsub.f32 %v1842, %v1968
        %v2029 = vsub.f32 %v1846, %v1964
        %v2030 = vsub.f32 %v1848, %v1968
        %v2031 = vsub.f32 %v1852, %v1964
        %v2032 = vsub.f32 %v1854, %v1968
        %v2033 = vsub.f32 %v1858, %v1964
        %v2034 = vsub.f32 %v1860, %v1968
        %v2035 = vmul.f32 %v1971, 1.442695
        %v2036 = vpow.pop %v2035
        %v2037 = vmul.f32 %v1972, 1.442695
        %v2038 = vpow.pop %v2037
        %v2039 = vmul.f32 %v1973, 1.442695
        %v2040 = vpow.pop %v2039
        %v2041 = vmul.f32 %v1974, 1.442695
        %v2042 = vpow.pop %v2041
        %v2043 = vmul.f32 %v1975, 1.442695
        %v2044 = vpow.pop %v2043
        %v2045 = vmul.f32 %v1976, 1.442695
        %v2046 = vpow.pop %v2045
        %v2047 = vmul.f32 %v1977, 1.442695
        %v2048 = vpow.pop %v2047
        %v2049 = vmul.f32 %v1978, 1.442695
        %v2050 = vpow.pop %v2049
        %v2051 = vmul.f32 %v1979, 1.442695
        %v2052 = vpow.pop %v2051
        %v2053 = vmul.f32 %v1980, 1.442695
        %v2054 = vpow.pop %v2053
        %v2055 = vmul.f32 %v1981, 1.442695
        %v2056 = vpow.pop %v2055
        %v2057 = vmul.f32 %v1982, 1.442695
        %v2058 = vpow.pop %v2057
        %v2059 = vmul.f32 %v1983, 1.442695
        %v2060 = vpow.pop %v2059
        %v2061 = vmul.f32 %v1984, 1.442695
        %v2062 = vpow.pop %v2061
        %v2063 = vmul.f32 %v1985, 1.442695
        %v2064 = vpow.pop %v2063
        %v2065 = vmul.f32 %v1986, 1.442695
        %v2066 = vpow.pop %v2065
        %v2067 = vmul.f32 %v1987, 1.442695
        %v2068 = vpow.pop %v2067
        %v2069 = vmul.f32 %v1988, 1.442695
        %v2070 = vpow.pop %v2069
        %v2071 = vmul.f32 %v1989, 1.442695
        %v2072 = vpow.pop %v2071
        %v2073 = vmul.f32 %v1990, 1.442695
        %v2074 = vpow.pop %v2073
        %v2075 = vmul.f32 %v1991, 1.442695
        %v2076 = vpow.pop %v2075
        %v2077 = vmul.f32 %v1992, 1.442695
        %v2078 = vpow.pop %v2077
        %v2079 = vmul.f32 %v1993, 1.442695
        %v2080 = vpow.pop %v2079
        %v2081 = vmul.f32 %v1994, 1.442695
        %v2082 = vpow.pop %v2081
        %v2083 = vmul.f32 %v1995, 1.442695
        %v2084 = vpow.pop %v2083
        %v2085 = vmul.f32 %v1996, 1.442695
        %v2086 = vpow.pop %v2085
        %v2087 = vmul.f32 %v1997, 1.442695
        %v2088 = vpow.pop %v2087
        %v2089 = vmul.f32 %v1998, 1.442695
        %v2090 = vpow.pop %v2089
        %v2091 = vmul.f32 %v1999, 1.442695
        %v2092 = vpow.pop %v2091
        %v2093 = vmul.f32 %v2000, 1.442695
        %v2094 = vpow.pop %v2093
        %v2095 = vmul.f32 %v2001, 1.442695
        %v2096 = vpow.pop %v2095
        %v2097 = vmul.f32 %v2002, 1.442695
        %v2098 = vpow.pop %v2097
        %v2099 = vmul.f32 %v2003, 1.442695
        %v2100 = vpow.pop %v2099
        %v2101 = vmul.f32 %v2004, 1.442695
        %v2102 = vpow.pop %v2101
        %v2103 = vmul.f32 %v2005, 1.442695
        %v2104 = vpow.pop %v2103
        %v2105 = vmul.f32 %v2006, 1.442695
        %v2106 = vpow.pop %v2105
        %v2107 = vmul.f32 %v2007, 1.442695
        %v2108 = vpow.pop %v2107
        %v2109 = vmul.f32 %v2008, 1.442695
        %v2110 = vpow.pop %v2109
        %v2111 = vmul.f32 %v2009, 1.442695
        %v2112 = vpow.pop %v2111
        %v2113 = vmul.f32 %v2010, 1.442695
        %v2114 = vpow.pop %v2113
        %v2115 = vmul.f32 %v2011, 1.442695
        %v2116 = vpow.pop %v2115
        %v2117 = vmul.f32 %v2012, 1.442695
        %v2118 = vpow.pop %v2117
        %v2119 = vmul.f32 %v2013, 1.442695
        %v2120 = vpow.pop %v2119
        %v2121 = vmul.f32 %v2014, 1.442695
        %v2122 = vpow.pop %v2121
        %v2123 = vmul.f32 %v2015, 1.442695
        %v2124 = vpow.pop %v2123
        %v2125 = vmul.f32 %v2016, 1.442695
        %v2126 = vpow.pop %v2125
        %v2127 = vmul.f32 %v2017, 1.442695
        %v2128 = vpow.pop %v2127
        %v2129 = vmul.f32 %v2018, 1.442695
        %v2130 = vpow.pop %v2129
        %v2131 = vmul.f32 %v2019, 1.442695
        %v2132 = vpow.pop %v2131
        %v2133 = vmul.f32 %v2020, 1.442695
        %v2134 = vpow.pop %v2133
        %v2135 = vmul.f32 %v2021, 1.442695
        %v2136 = vpow.pop %v2135
        %v2137 = vmul.f32 %v2022, 1.442695
        %v2138 = vpow.pop %v2137
        %v2139 = vmul.f32 %v2023, 1.442695
        %v2140 = vpow.pop %v2139
        %v2141 = vmul.f32 %v2024, 1.442695
        %v2142 = vpow.pop %v2141
        %v2143 = vmul.f32 %v2025, 1.442695
        %v2144 = vpow.pop %v2143
        %v2145 = vmul.f32 %v2026, 1.442695
        %v2146 = vpow.pop %v2145
        %v2147 = vmul.f32 %v2027, 1.442695
        %v2148 = vpow.pop %v2147
        %v2149 = vmul.f32 %v2028, 1.442695
        %v2150 = vpow.pop %v2149
        %v2151 = vmul.f32 %v2029, 1.442695
        %v2152 = vpow.pop %v2151
        %v2153 = vmul.f32 %v2030, 1.442695
        %v2154 = vpow.pop %v2153
        %v2155 = vmul.f32 %v2031, 1.442695
        %v2156 = vpow.pop %v2155
        %v2157 = vmul.f32 %v2032, 1.442695
        %v2158 = vpow.pop %v2157
        %v2159 = vmul.f32 %v2033, 1.442695
        %v2160 = vpow.pop %v2159
        %v2161 = vmul.f32 %v2034, 1.442695
        %v2162 = vpow.pop %v2161
        %2163 = vmatprep.subr.mxu0 %v2038
        %2164 = vmatpush1.msra.mxu0 %v2036
        %2165 = vmatprep.subr.mxu0 %v2042
        %2166 = vmatpush1.msra.mxu0 %v2040
        %2167 = vmatprep.subr.mxu0 %v2046
        %2168 = vmatpush1.msra.mxu0 %v2044
        %2169 = vmatprep.subr.mxu0 %v2050
        %2170 = vmatpush1.msra.mxu0 %v2048
        %2171 = vmatprep.subr.mxu0 %v2054
        %2172 = vmatpush1.msra.mxu0 %v2052
        %2173 = vmatprep.subr.mxu0 %v2058
        %2174 = vmatpush1.msra.mxu0 %v2056
        %2175 = vmatprep.subr.mxu0 %v2062
        %2176 = vmatpush1.msra.mxu0 %v2060
        %2177 = vmatprep.subr.mxu0 %v2066
        %2178 = vmatpush1.msra.mxu0 %v2064
        %2179 = vmatprep.subr.mxu0 %v2070
        %2180 = vmatpush1.msra.mxu0 %v2068
        %2181 = vmatprep.subr.mxu0 %v2074
        %2182 = vmatpush1.msra.mxu0 %v2072
        %2183 = vmatprep.subr.mxu0 %v2078
        %2184 = vmatpush1.msra.mxu0 %v2076
        %2185 = vmatprep.subr.mxu0 %v2082
        %2186 = vmatpush1.msra.mxu0 %v2080
        %2187 = vmatprep.subr.mxu0 %v2086
        %2188 = vmatpush1.msra.mxu0 %v2084
        %2189 = vmatprep.subr.mxu0 %v2090
        %2190 = vmatpush1.msra.mxu0 %v2088
        %2191 = vmatprep.subr.mxu0 %v2094
        %2192 = vmatpush1.msra.mxu0 %v2092
        %2193 = vmatprep.subr.mxu0 %v2098
        %2194 = vmatpush1.msra.mxu0 %v2096
        %2195 = vmatprep.subr.mxu0 %v2102
        %2196 = vmatpush1.msra.mxu0 %v2100
        %2197 = vmatprep.subr.mxu0 %v2106
        %2198 = vmatpush1.msra.mxu0 %v2104
        %2199 = vmatprep.subr.mxu0 %v2110
        %2200 = vmatpush1.msra.mxu0 %v2108
        %2201 = vmatprep.subr.mxu0 %v2114
        %2202 = vmatpush1.msra.mxu0 %v2112
        %2203 = vmatprep.subr.mxu0 %v2118
        %2204 = vmatpush1.msra.mxu0 %v2116
        %2205 = vmatprep.subr.mxu0 %v2122
        %2206 = vmatpush1.msra.mxu0 %v2120
        %2207 = vmatprep.subr.mxu0 %v2126
        %2208 = vmatpush1.msra.mxu0 %v2124
        %2209 = vmatprep.subr.mxu0 %v2130
        %2210 = vmatpush1.msra.mxu0 %v2128
        %2211 = vmatprep.subr.mxu0 %v2134
        %2212 = vmatpush1.msra.mxu0 %v2132
        %2213 = vmatprep.subr.mxu0 %v2138
        %2214 = vmatpush1.msra.mxu0 %v2136
        %2215 = vmatprep.subr.mxu0 %v2142
        %2216 = vmatpush1.msra.mxu0 %v2140
        %2217 = vmatprep.subr.mxu0 %v2146
        %2218 = vmatpush1.msra.mxu0 %v2144
        %2219 = vmatprep.subr.mxu0 %v2150
        %2220 = vmatpush1.msra.mxu0 %v2148
        %2221 = vmatprep.subr.mxu0 %v2154
        %2222 = vmatpush1.msra.mxu0 %v2152
        %2223 = vmatprep.subr.mxu0 %v2158
        %2224 = vmatpush1.msra.mxu0 %v2156
        %2225 = vmatprep.subr.mxu0 %v2162
        %2226 = vmatpush1.msra.mxu0 %v2160
        %2227 = vmatprep.mubr.f32.mxu0 1.0
        %2228 = vmatmul.mubr.f32.gmra.mrb[0].mxu0 1.0
        %v2229 = vpop.f32.mrb[0].mxu0
        %v2230 = vadd.f32 0.0, %v2229
        %v2231 = vpop.f32.mrb[0].mxu0
        %v2232 = vadd.f32 0.0, %v2231
        %2233 = vdwg.mxu0
        %s2234 = scalar_lea.vmem [#allocation4], 2
        %v2235 = vld [vmem:[%s2234] sm:$0x3]
        %v2236 = vmul.f32 %v1959, %v2235
        %v2239 = vcombine.low %v2230, %v2232
        %v2241 = vunpack.c.l.s4 1966171168
        %v2242 = vunpack.c.0.s8 %v2241
        %v2243 = vlaneseq
        %v2244 = vshrl.u32 %v2243, 7
        %v2245 = vsub.s32 %v2242, %v2244
        %v2246 = vrot.slane %v2239, %v2245
        %v2248 = vunpack.c.l.s4 1966171168
        %v2249 = vunpack.c.0.s8 %v2248
        %v2250 = vlaneseq
        %v2251 = vshrl.u32 %v2250, 7
        %v2252 = vsub.s32 %v2249, %v2251
        %v2253 = vrot.slane %v2246, %v2252
        %v2255 = vadd.f32 %v2236, %v2253
        %2256 = vst.msk [vmem:[%s2234] sm:$0x3] %vm1352, %v2255
        %v2257 = vld [vmem:[#allocation5 + $0x10] sm:$0xff]
        %v2258 = vld [vmem:[#allocation5 + $0x18] sm:$0xff]
        %v2260 = vlaneseq
        %v2261 = vshrl.u32 %v2260, 7
        %v2262 = vsub.s32 0, %v2261
        %v2263 = vrot.slane %v1959, %v2262
        %v2264 = vlaneseq
        %v2265 = vshrl.u32 %v2264, 7
        %v2266 = vsub.s32 1, %v2265
        %v2267 = vrot.slane %v1959, %v2266
        %v2270 = vmul.f32 %v2263, %v2257
        %v2271 = vmul.f32 %v2267, %v2258
        %2272 = vmatprep.subr.mxu0 %v2038
        %2273 = vmatpush1.msra.mxu0 %v2036
        %2274 = vmatprep.subr.mxu0 %v2042
        %2275 = vmatpush1.msra.mxu0 %v2040
        %2276 = vmatprep.subr.mxu0 %v2046
        %2277 = vmatpush1.msra.mxu0 %v2044
        %2278 = vmatprep.subr.mxu0 %v2050
        %2279 = vmatpush1.msra.mxu0 %v2048
        %2280 = vmatprep.subr.mxu0 %v2054
        %2281 = vmatpush1.msra.mxu0 %v2052
        %2282 = vmatprep.subr.mxu0 %v2058
        %2283 = vmatpush1.msra.mxu0 %v2056
        %2284 = vmatprep.subr.mxu0 %v2062
        %2285 = vmatpush1.msra.mxu0 %v2060
        %2286 = vmatprep.subr.mxu0 %v2066
        %2287 = vmatpush1.msra.mxu0 %v2064
        %2288 = vmatprep.subr.mxu0 %v2070
        %2289 = vmatpush1.msra.mxu0 %v2068
        %2290 = vmatprep.subr.mxu0 %v2074
        %2291 = vmatpush1.msra.mxu0 %v2072
        %2292 = vmatprep.subr.mxu0 %v2078
        %2293 = vmatpush1.msra.mxu0 %v2076
        %2294 = vmatprep.subr.mxu0 %v2082
        %2295 = vmatpush1.msra.mxu0 %v2080
        %2296 = vmatprep.subr.mxu0 %v2086
        %2297 = vmatpush1.msra.mxu0 %v2084
        %2298 = vmatprep.subr.mxu0 %v2090
        %2299 = vmatpush1.msra.mxu0 %v2088
        %2300 = vmatprep.subr.mxu0 %v2094
        %2301 = vmatpush1.msra.mxu0 %v2092
        %2302 = vmatprep.subr.mxu0 %v2098
        %2303 = vmatpush1.msra.mxu0 %v2096
        %2304 = vmatprep.subr.mxu0 %v2102
        %2305 = vmatpush1.msra.mxu0 %v2100
        %2306 = vmatprep.subr.mxu0 %v2106
        %2307 = vmatpush1.msra.mxu0 %v2104
        %2308 = vmatprep.subr.mxu0 %v2110
        %2309 = vmatpush1.msra.mxu0 %v2108
        %2310 = vmatprep.subr.mxu0 %v2114
        %2311 = vmatpush1.msra.mxu0 %v2112
        %2312 = vmatprep.subr.mxu0 %v2118
        %2313 = vmatpush1.msra.mxu0 %v2116
        %2314 = vmatprep.subr.mxu0 %v2122
        %2315 = vmatpush1.msra.mxu0 %v2120
        %2316 = vmatprep.subr.mxu0 %v2126
        %2317 = vmatpush1.msra.mxu0 %v2124
        %2318 = vmatprep.subr.mxu0 %v2130
        %2319 = vmatpush1.msra.mxu0 %v2128
        %2320 = vmatprep.subr.mxu0 %v2134
        %2321 = vmatpush1.msra.mxu0 %v2132
        %2322 = vmatprep.subr.mxu0 %v2138
        %2323 = vmatpush1.msra.mxu0 %v2136
        %2324 = vmatprep.subr.mxu0 %v2142
        %2325 = vmatpush1.msra.mxu0 %v2140
        %2326 = vmatprep.subr.mxu0 %v2146
        %2327 = vmatpush1.msra.mxu0 %v2144
        %2328 = vmatprep.subr.mxu0 %v2150
        %2329 = vmatpush1.msra.mxu0 %v2148
        %2330 = vmatprep.subr.mxu0 %v2154
        %2331 = vmatpush1.msra.mxu0 %v2152
        %2332 = vmatprep.subr.mxu0 %v2158
        %2333 = vmatpush1.msra.mxu0 %v2156
        %2334 = vmatprep.subr.mxu0 %v2162
        %2335 = vmatpush1.msra.mxu0 %v2160
        %2336 = vmatprep.mubr.f32.mxu0 %v533
        %2337 = vmatmul.mubr.f32.gmra.mrb[0].mxu0 %v531
        %v2338 = vpop.f32.mrb[0].mxu0
        %v2339 = vadd.f32 0.0, %v2338
        %v2340 = vpop.f32.mrb[0].mxu0
        %v2341 = vadd.f32 0.0, %v2340
        %2342 = vdwg.mxu0
        %v2343 = vadd.f32 %v2270, %v2339
        %v2344 = vadd.f32 %v2271, %v2341
        %2345 = vst [vmem:[#allocation5 + $0x10] sm:$0xff] %v2343
        %2346 = vst [vmem:[#allocation5 + $0x18] sm:$0xff] %v2344
        %2347 = vst.msk [vmem:[%s1862] sm:$0x3] %vm1352, %v1956
        // Predicated region
        $region53: #{tpu_custom_call.1} parent=39 // pred_check
          %p2348 = pneg %p310
        $region54: #{tpu_custom_call.1} parent=39 // pred_check_branch
          %2350 = sbr.rel (%p2348) target = $region56
        $region55: #{tpu_custom_call.1} parent=39 // pred_region
          %v2351 = vld [vmem:[#allocation4] sm:$0x3]
          %v2352 = vrcp.pop %v2351
          %v2353 = vld [vmem:[#allocation5] sm:$0xff]
          %v2354 = vld [vmem:[#allocation5 + $0x8] sm:$0xff]
          %v2356 = vlaneseq
          %v2357 = vshrl.u32 %v2356, 7
          %v2358 = vsub.s32 0, %v2357
          %v2359 = vrot.slane %v2352, %v2358
          %v2360 = vlaneseq
          %v2361 = vshrl.u32 %v2360, 7
          %v2362 = vsub.s32 1, %v2361
          %v2363 = vrot.slane %v2352, %v2362
          %v2366 = vmul.f32 %v2353, %v2359
          %v2367 = vmul.f32 %v2354, %v2363
          %2368 = vst [vmem:[#allocation5] sm:$0xff] %v2366
          %2369 = vst [vmem:[#allocation5 + $0x8] sm:$0xff] %v2367
          %v2370 = vld [vmem:[%s2234] sm:$0x3]
          %v2371 = vrcp.pop %v2370
          %v2372 = vld [vmem:[#allocation5 + $0x10] sm:$0xff]
          %v2373 = vld [vmem:[#allocation5 + $0x18] sm:$0xff]
          %v2375 = vlaneseq
          %v2376 = vshrl.u32 %v2375, 7
          %v2377 = vsub.s32 0, %v2376
          %v2378 = vrot.slane %v2371, %v2377
          %v2379 = vlaneseq
          %v2380 = vshrl.u32 %v2379, 7
          %v2381 = vsub.s32 1, %v2380
          %v2382 = vrot.slane %v2371, %v2381
          %v2385 = vmul.f32 %v2372, %v2378
          %v2386 = vmul.f32 %v2373, %v2382
          %2387 = vst [vmem:[#allocation5 + $0x10] sm:$0xff] %v2385
          %2388 = vst [vmem:[#allocation5 + $0x18] sm:$0xff] %v2386
          %v2389 = vld [vmem:[%s4] sm:$0xff]
          %v2390 = vld [vmem:[%s4 + $0x8] sm:$0xff]
          %v2391 = vld [vmem:[#allocation5] sm:$0xff]
          %v2392 = vld [vmem:[#allocation5 + $0x8] sm:$0xff]
          %v2393 = vld [vmem:[#allocation5 + $0x10] sm:$0xff]
          %v2394 = vld [vmem:[#allocation5 + $0x18] sm:$0xff]
          %v2396 = vsel %vm433, %v2389, 0
          %v2399 = vsel %vm433, %v2390, 0
          %2401 = vmatprep.subr.mxu0 %v2392
          %2402 = vmatpush1.msra.mxu0 %v2391
          %2403 = vmatprep.subr.mxu0 %v2394
          %2404 = vmatpush1.msra.mxu0 %v2393
          %2405 = vmatprep.subr.mxu0 0.0
          %2406 = vmatpush1.msra.mxu0 0.0
          %2407 = vmatprep.subr.mxu0 0.0
          %2408 = vmatpush1.msra.mxu0 0.0
          %2409 = vmatprep.subr.mxu0 0.0
          %2410 = vmatpush1.msra.mxu0 0.0
          %2411 = vmatprep.subr.mxu0 0.0
          %2412 = vmatpush1.msra.mxu0 0.0
          %2413 = vmatprep.subr.mxu0 0.0
          %2414 = vmatpush1.msra.mxu0 0.0
          %2415 = vmatprep.subr.mxu0 0.0
          %2416 = vmatpush1.msra.mxu0 0.0
          %2417 = vmatprep.subr.mxu0 0.0
          %2418 = vmatpush1.msra.mxu0 0.0
          %2419 = vmatprep.subr.mxu0 0.0
          %2420 = vmatpush1.msra.mxu0 0.0
          %2421 = vmatprep.subr.mxu0 0.0
          %2422 = vmatpush1.msra.mxu0 0.0
          %2423 = vmatprep.subr.mxu0 0.0
          %2424 = vmatpush1.msra.mxu0 0.0
          %2425 = vmatprep.subr.mxu0 0.0
          %2426 = vmatpush1.msra.mxu0 0.0
          %2427 = vmatprep.subr.mxu0 0.0
          %2428 = vmatpush1.msra.mxu0 0.0
          %2429 = vmatprep.subr.mxu0 0.0
          %2430 = vmatpush1.msra.mxu0 0.0
          %2431 = vmatprep.subr.mxu0 0.0
          %2432 = vmatpush1.msra.mxu0 0.0
          %2433 = vmatprep.subr.mxu0 0.0
          %2434 = vmatpush1.msra.mxu0 0.0
          %2435 = vmatprep.subr.mxu0 0.0
          %2436 = vmatpush1.msra.mxu0 0.0
          %2437 = vmatprep.subr.mxu0 0.0
          %2438 = vmatpush1.msra.mxu0 0.0
          %2439 = vmatprep.subr.mxu0 0.0
          %2440 = vmatpush1.msra.mxu0 0.0
          %2441 = vmatprep.subr.mxu0 0.0
          %2442 = vmatpush1.msra.mxu0 0.0
          %2443 = vmatprep.subr.mxu0 0.0
          %2444 = vmatpush1.msra.mxu0 0.0
          %2445 = vmatprep.subr.mxu0 0.0
          %2446 = vmatpush1.msra.mxu0 0.0
          %2447 = vmatprep.subr.mxu0 0.0
          %2448 = vmatpush1.msra.mxu0 0.0
          %2449 = vmatprep.subr.mxu0 0.0
          %2450 = vmatpush1.msra.mxu0 0.0
          %2451 = vmatprep.subr.mxu0 0.0
          %2452 = vmatpush1.msra.mxu0 0.0
          %2453 = vmatprep.subr.mxu0 0.0
          %2454 = vmatpush1.msra.mxu0 0.0
          %2455 = vmatprep.subr.mxu0 0.0
          %2456 = vmatpush1.msra.mxu0 0.0
          %2457 = vmatprep.subr.mxu0 0.0
          %2458 = vmatpush1.msra.mxu0 0.0
          %2459 = vmatprep.subr.mxu0 0.0
          %2460 = vmatpush1.msra.mxu0 0.0
          %2461 = vmatprep.subr.mxu0 0.0
          %2462 = vmatpush1.msra.mxu0 0.0
          %2463 = vmatprep.subr.mxu0 0.0
          %2464 = vmatpush1.msra.mxu0 0.0
          %2465 = vmatprep.mubr.f32.mxu0 0.0
          %2466 = vmatmul.mubr.f32.gmra.mrb[0].mxu0 %v2396
          %v2467 = vpop.f32.mrb[0].mxu0
          %v2468 = vadd.f32 0.0, %v2467
          %v2469 = vpop.f32.mrb[0].mxu0
          %v2470 = vadd.f32 0.0, %v2469
          %2471 = vmatprep.mubr.f32.mxu0 0.0
          %2472 = vmatmul.mubr.f32.gmra.mrb[0].mxu0 %v2399
          %v2473 = vpop.f32.mrb[0].mxu0
          %v2474 = vadd.f32 0.0, %v2473
          %v2475 = vpop.f32.mrb[0].mxu0
          %v2476 = vadd.f32 0.0, %v2475
          %2477 = vdwg.mxu0
          %2478 = vst [vmem:[%s307] sm:$0xff] %v2468
          %2479 = vst [vmem:[%s307 + $0x8] sm:$0xff] %v2470
          %2480 = vst [vmem:[%s307 + $0x10] sm:$0xff] %v2474
          %2481 = vst [vmem:[%s307 + $0x18] sm:$0xff] %v2476
        $region56: #{tpu_custom_call.1} parent=39 // pred_fallthru
          _
        %s2482 = sand.u32 %s171, 1
        %s2483 = scalar_lea.sflag [#allocation8], %s2482
        %s2484 = sand.u32 %s171, 1
        %s2485 = smul.addr %s2484, 32
        %s2486 = scalar_lea.vmem [#allocation11], %s2485
        // Predicated region
        $region57: #{tpu_custom_call.1} parent=39 // pred_check
          %p2487 = pneg %p181
        $region58: #{tpu_custom_call.1} parent=39 // pred_check_branch
          %2489 = sbr.rel (%p2487) target = $region60
        $region59: #{tpu_custom_call.1} parent=39 // pred_region
          %s2490 = smul.u32 2, %s31
          %s2492 = ssub.s32 512, 512
          %2493 = vsyncadd %s2483, %s2492
          %s2494 = smul.addr %s30, 4
          %s2495 = sadd.s32 %s2490, %s2494
          %s2496 = smul.addr %s2495, 128
          %s2497 = scalar_lea.hbm %s5, %s2496
          %s2498 = sshll.u32 %s2486, 4
          %s2499 = int_to_ptr.vmem [resolvable:$true] %s2498
          %2504 = dma.vmem_to_hbm [thread:$0]  %s2499, 512, %s2497, %s2483, 256, 256, 16
        $region60: #{tpu_custom_call.1} parent=39 // pred_fallthru
          _
      $region40: #{tpu_custom_call.1} parent=5 // pred_fallthru
        _
      %p2505 = scmp.le.s32.totalorder 2, %s20
      // Predicated region
      $region61: #{tpu_custom_call.1} parent=5 // pred_check
        %p2506 = pneg %p2505
      $region62: #{tpu_custom_call.1} parent=5 // pred_check_branch
        %2508 = sbr.rel (%p2506) target = $region64
      $region63: #{tpu_custom_call.1} parent=5 // pred_region
        %s2509 = ssub.s32 %s20, 2
        // Predicated region
        $region65: #{tpu_custom_call.1} parent=63 // pred_check
          %p2510 = pneg %p187
        $region66: #{tpu_custom_call.1} parent=63 // pred_check_branch
          %2512 = sbr.rel (%p2510) target = $region68
        $region67: #{tpu_custom_call.1} parent=63 // pred_region
          %s2513 = sand.u32 %s172, 1
          %s2514 = scalar_lea.sflag [#allocation8], %s2513
          %s2515 = sand.u32 %s172, 1
          %s2516 = smul.addr %s2515, 32
          %s2517 = scalar_lea.vmem [#allocation11], %s2516
          %2518 = dma.done %s2514, 512
        $region68: #{tpu_custom_call.1} parent=63 // pred_fallthru
          _
      $region64: #{tpu_custom_call.1} parent=5 // pred_fallthru
        _
    $region6: #{tpu_custom_call.1} parent=1 // loop_footer
      %s24 = sadd.s32 1, %s20
    $region7: #{tpu_custom_call.1} parent=1 // loop_footer_branch
      %19 = sbr.rel target = $region3
    $region8: #{tpu_custom_call.1} parent=1 // loop_exit
      _
    %2519 = vsyncpa [#allocation7], 1
    %s2520 = scalar_lea.sflag [#allocation7], 1
    %2521 = vsyncpa %s2520, 1
    %2522 = vsyncpa [#allocation10], 1
    %s2523 = scalar_lea.sflag [#allocation10], 1
    %2524 = vsyncpa %s2523, 1
    %2525 = vsyncpa [#allocation8], 1
    %s2526 = scalar_lea.sflag [#allocation8], 1
    %2527 = vsyncpa %s2526, 1

</llo_original>
